<compile_context>
chip_gen: v7x
topology: tpu7x:2x2x1
jax: 0.10.0
libtpu: 0.0.40
codegen_flags: <defaults>
</compile_context>

<pallas_src>
import functools
import math

import jax
import jax.numpy as jnp
from jax.experimental import pallas as pl
from jax.experimental.pallas import tpu as pltpu

F32 = jnp.float32
BF16 = jnp.bfloat16


def _pick_row_tile(oh, ow, max_pixels=512):
    """Largest divisor TOH of OH with TOH*OW lane-dense (%128==0) within budget."""
    divisors = [t for t in range(1, oh + 1) if oh % t == 0]
    dense = [t for t in divisors if (t * ow) % 128 == 0]
    cand = [t for t in dense if t * ow <= max_pixels]
    if cand:
        return max(cand)
    if dense:
        return min(dense)
    return oh  # whole image: trailing dim == full array dim is always legal


# ---------------------------------------------------------------------------
# Pallas kernel: fused KxK conv (one wide-K GEMM) + bias + activation
# ---------------------------------------------------------------------------
def _conv_block_kernel(x_ref, w_ref, b_ref, o_ref, patch_ref, *,
                       kh, kw, toh, ow, cin, act, slope):
    """One (batch, row-tile, cout-tile) block.

    x_ref:     (1, TOH+kh-1, Wp, Cin)   padded bf16 NHWC row tile (incl. halo)
    w_ref:     (kh*kw*Cin, TCO)         bf16 weight slab, rows ordered (ki,kj,c)
    b_ref:     (1, TCO)                 f32 bias
    o_ref:     (1, TCO, TOH*OW)         f32 NCHW(-flattened) output tile
    patch_ref: (TOH*OW, kh*kw*Cin)      bf16 im2col scratch, reused over TCO axis
    """
    pix = toh * ow
    kdim = kh * kw * cin

    # Build the im2col patch once per (batch, row-tile); it is constant across
    # the innermost (sequential, "arbitrary") Cout-tile grid axis.
    @pl.when(pl.program_id(2) == 0)
    def _():
        cols = []
        for ki in range(kh):                     # static unroll over taps
            for kj in range(kw):
                win = x_ref[0, ki:ki + toh, kj:kj + ow, :]
                cols.append(win.reshape(pix, cin))
        patch_ref[...] = jnp.concatenate(cols, axis=-1)      # (pix, kh*kw*Cin)

    # One wide-K GEMM on the MXU (bf16 operands, f32 accumulation).
    y = jnp.dot(patch_ref[...], w_ref[...],
                preferred_element_type=jnp.float32)           # (pix, TCO)
    y = y + b_ref[...]
    if act == 'relu':
        y = jnp.maximum(y, 0.0)
    elif act == 'lrelu':
        y = jnp.where(y >= 0.0, y, slope * y)

    # Channels -> sublanes, pixels -> lanes: store NCHW directly (lane dense).
    o_ref[...] = y.T.reshape(1, o_ref.shape[1], pix)


# ---------------------------------------------------------------------------
# Spectral norm (parameter-sized math, plain jnp — mirrors one power-iteration
# forward of torch.nn.utils.spectral_norm).
# ---------------------------------------------------------------------------
def _spectral_normalize(w, u, eps=1e-12):
    o = w.shape[0]
    wm = w.reshape(o, -1)
    v = wm.T @ u
    v = v / jnp.maximum(jnp.linalg.norm(v), eps)
    u_new = wm @ v
    u_new = u_new / jnp.maximum(jnp.linalg.norm(u_new), eps)
    sigma = jnp.dot(u_new, wm @ v)
    return w / jnp.maximum(sigma, eps)


# ---------------------------------------------------------------------------
# Conv2dBlock forward wrapper (NCHW in / NCHW out, like the PyTorch module)
# ---------------------------------------------------------------------------
def conv2d_block(x, params, *, kernel_size=3, stride=1, padding=0,
                 pad_type='reflect', norm=None, activation=None,
                 lrelu_slope=0.01):
    """activation(norm(spectral_norm_conv(pad(x)))) — Conv2dBlock.forward."""
    if stride != 1:
        raise NotImplementedError("only stride=1 is implemented")      # TODO(synk)
    if norm is not None:
        raise NotImplementedError("only norm_layer=None is implemented")  # TODO(synk)
    assert activation in (None, 'relu', 'lrelu')

    w = params['w'].astype(F32)
    b = params['b']
    u = params['u'].astype(F32)
    cout, cin, kh, kw = w.shape
    B, C, H, W = x.shape
    assert C == cin and kh == kernel_size and kw == kernel_size

    # --- parameter-side math (tiny): spectral norm + weight packing ----------
    w_sn = _spectral_normalize(w, u)
    kdim = kh * kw * cin
    # rows ordered (ki, kj, cin) to match the in-kernel patch ordering
    w_packed = jnp.transpose(w_sn, (2, 3, 1, 0)).reshape(kdim, cout).astype(BF16)
    bias = jnp.zeros((cout,), F32) if b is None else b.astype(F32)
    bias = bias.reshape(1, cout)

    # --- input layout: NCHW -> padded bf16 NHWC, halo'd row tiles ------------
    xh = jnp.transpose(x, (0, 2, 3, 1)).astype(BF16)
    if padding > 0:
        mode = {'reflect': 'reflect', 'replicate': 'edge', 'zero': 'constant'}[pad_type]
        xh = jnp.pad(xh, ((0, 0), (padding, padding), (padding, padding), (0, 0)),
                     mode=mode)
    Hp, Wp = H + 2 * padding, W + 2 * padding
    OH, OW = Hp - kh + 1, Wp - kw + 1

    TOH = _pick_row_tile(OH, OW)
    n_rt = OH // TOH
    THP = TOH + kh - 1
    pix = TOH * OW
    # duplicate the (kh-1)-row halo so row-tile blocks are non-overlapping
    x_tiles = jnp.stack([xh[:, r * TOH:r * TOH + THP] for r in range(n_rt)],
                        axis=1).reshape(B * n_rt, THP, Wp, cin)

    # --- output-channel tiling (no channel padding) ---------------------------
    TCO = 256 if cout % 256 == 0 else (128 if cout % 128 == 0 else cout)
    n_ct = cout // TCO

    # --- VMEM budget (per-block, double-buffered) ------------------------------
    blk_bytes = (2 * THP * Wp * cin * 2          # x tile (bf16)
                 + 2 * kdim * TCO * 2            # weights (bf16)
                 + 2 * TCO * 4                   # bias (f32)
                 + 2 * TCO * pix * 4             # output tile (f32)
                 + pix * max(kdim, 128) * 2)     # patch scratch (bf16, lane pad)
    vmem_limit = int(min(48 * 1024 * 1024, max(8 * 1024 * 1024, 4 * blk_bytes)))

    kernel = functools.partial(_conv_block_kernel, kh=kh, kw=kw, toh=TOH, ow=OW,
                               cin=cin, act=activation, slope=lrelu_slope)

    out = pl.pallas_call(
        kernel,
        out_shape=jax.ShapeDtypeStruct((B, cout, OH * OW), F32),
        grid_spec=pltpu.PrefetchScalarGridSpec(
            num_scalar_prefetch=0,
            grid=(B, n_rt, n_ct),
            in_specs=[
                pl.BlockSpec((1, THP, Wp, cin),
                             lambda bi, r, j: (bi * n_rt + r, 0, 0, 0)),
                pl.BlockSpec((kdim, TCO), lambda bi, r, j: (0, j)),
                pl.BlockSpec((1, TCO), lambda bi, r, j: (0, j)),
            ],
            out_specs=pl.BlockSpec((1, TCO, pix), lambda bi, r, j: (bi, j, r)),
            scratch_shapes=[pltpu.VMEM((pix, kdim), BF16)],
        ),
        compiler_params=pltpu.CompilerParams(
            dimension_semantics=("parallel", "parallel", "arbitrary"),
            vmem_limit_bytes=vmem_limit,
        ),
    )(x_tiles, w_packed, bias)

    # contiguous (free) reshape back to the NCHW image layout
    return out.reshape(B, cout, OH, OW)


# ---------------------------------------------------------------------------
# Pure-JAX reference for correctness checking (f32, HIGHEST precision)
# ---------------------------------------------------------------------------
def conv2d_block_ref(x, params, *, kernel_size=3, padding=0, pad_type='reflect',
                     activation=None, lrelu_slope=0.01):
    w = _spectral_normalize(params['w'].astype(F32), params['u'].astype(F32))
    b = params['b']
    cout, cin, kh, kw = w.shape
    xh = jnp.transpose(x, (0, 2, 3, 1)).astype(F32)
    if padding > 0:
        mode = {'reflect': 'reflect', 'replicate': 'edge', 'zero': 'constant'}[pad_type]
        xh = jnp.pad(xh, ((0, 0), (padding, padding), (padding, padding), (0, 0)),
                     mode=mode)
    _, Hp, Wp, _ = xh.shape
    OH, OW = Hp - kh + 1, Wp - kw + 1
    cols = []
    for ki in range(kh):
        for kj in range(kw):
            cols.append(xh[:, ki:ki + OH, kj:kj + OW, :])
    patch = jnp.concatenate(cols, axis=-1)                 # (B, OH, OW, kh*kw*cin)
    wm = jnp.transpose(w, (2, 3, 1, 0)).reshape(kh * kw * cin, cout)
    y = jnp.einsum('bhwk,kc->bhwc', patch, wm,
                   precision=jax.lax.Precision.HIGHEST)
    if b is not None:
        y = y + b[None, None, None, :].astype(F32)
    if activation == 'relu':
        y = jnp.maximum(y, 0.0)
    elif activation == 'lrelu':
        y = jnp.where(y >= 0.0, y, lrelu_slope * y)
    return jnp.transpose(y, (0, 3, 1, 2))


if __name__ == "__main__":
    def make_params(key, cin, cout, k):
        kw_, kb, ku = jax.random.split(key, 3)
        return {
            'w': (1.0 / math.sqrt(cin * k * k)) *
                 jax.random.normal(kw_, (cout, cin, k, k), F32),
            'b': 0.1 * jax.random.normal(kb, (cout,), F32),
            'u': jax.random.normal(ku, (cout,), F32),
        }

    key = jax.random.PRNGKey(0)
    cases = [
        dict(B=2, Cin=4, H=16, W=16, Cout=8, k=3, pad=1, pad_type='reflect', act=None),
        dict(B=2, Cin=4, H=16, W=16, Cout=8, k=3, pad=1, pad_type='reflect', act='relu'),
        # exercises row tiling (n_rt=2), Cout tiling (n_ct=2), zero pad, lrelu
        dict(B=1, Cin=8, H=32, W=32, Cout=512, k=3, pad=1, pad_type='zero', act='lrelu'),
    ]

    for idx, c in enumerate(cases):
        key, kx, kp = jax.random.split(key, 3)
        x = jax.random.normal(kx, (c['B'], c['Cin'], c['H'], c['W']), F32)
        params = make_params(kp, c['Cin'], c['Cout'], c['k'])

        fwd = jax.jit(functools.partial(
            conv2d_block, kernel_size=c['k'], stride=1, padding=c['pad'],
            pad_type=c['pad_type'], activation=c['act']))
        y = jax.block_until_ready(fwd(x, params))

        assert y.shape == (c['B'], c['Cout'], c['H'], c['W'])
        assert bool(jnp.all(jnp.isfinite(y)))
        if c['act'] == 'relu':
            assert float(jnp.min(y)) >= 0.0

        y_ref = conv2d_block_ref(x, params, kernel_size=c['k'], padding=c['pad'],
                                 pad_type=c['pad_type'], activation=c['act'])
        scale = float(jnp.max(jnp.abs(y_ref))) + 1e-6
        err = float(jnp.max(jnp.abs(y - y_ref)))
        # bf16 MXU operands vs f32 HIGHEST reference
        assert err <= 1e-3 + 3e-2 * scale, f"case {idx} mismatch: err={err}, scale={scale}"

    print("KERNEL_OK")
</pallas_src>

<mosaic_0001>
module attributes {stable_mosaic.version = 11 : i64} {
  func.func @_conv_block_kernel(%arg0: i32, %arg1: i32, %arg2: i32, %arg3: memref<1x18x18x4xbf16, #tpu.memory_space<vmem>>, %arg4: memref<36x8xbf16, #tpu.memory_space<vmem>>, %arg5: memref<1x8xf32, #tpu.memory_space<vmem>>, %arg6: memref<1x8x256xf32, #tpu.memory_space<vmem>>, %arg7: memref<256x36xbf16, #tpu.memory_space<vmem>>) attributes {dimension_semantics = [#tpu.dimension_semantics<parallel>, #tpu.dimension_semantics<parallel>, #tpu.dimension_semantics<arbitrary>], iteration_bounds = array<i64: 2, 1, 1>, scalar_prefetch = 0 : i64, scratch_operands = 1 : i64, tpu.core_type = #tpu.core_type<tc>, window_params = [{transform_indices = @transform_0, window_bounds = array<i64: 1, 18, 18, 4>}, {transform_indices = @transform_1, window_bounds = array<i64: 36, 8>}, {transform_indices = @transform_2, window_bounds = array<i64: 1, 8>}, {transform_indices = @transform_3, window_bounds = array<i64: 1, 8, 256>}]} {
    %c0_i32 = arith.constant 0 : i32
    %0 = arith.cmpi eq, %arg2, %c0_i32 : i32
    %1 = arith.extui %0 : i1 to i32
    %c0_i32_0 = arith.constant 0 : i32
    %2 = arith.cmpi ne, %1, %c0_i32_0 : i32
    scf.if %2 {
      %c0_9 = arith.constant 0 : index
      %c0_10 = arith.constant 0 : index
      %c0_11 = arith.constant 0 : index
      %c0_12 = arith.constant 0 : index
      %12 = vector.load %arg3[%c0_9, %c0_10, %c0_11, %c0_12] : memref<1x18x18x4xbf16, #tpu.memory_space<vmem>>, vector<1x16x16x4xbf16>
      %13 = vector.shape_cast %12 : vector<1x16x16x4xbf16> to vector<16x16x4xbf16>
      %14 = vector.shape_cast %13 : vector<16x16x4xbf16> to vector<256x4xbf16>
      %c0_13 = arith.constant 0 : index
      %c0_14 = arith.constant 0 : index
      %c1 = arith.constant 1 : index
      %c0_15 = arith.constant 0 : index
      %15 = vector.load %arg3[%c0_13, %c0_14, %c1, %c0_15] : memref<1x18x18x4xbf16, #tpu.memory_space<vmem>>, vector<1x16x16x4xbf16>
      %16 = vector.shape_cast %15 : vector<1x16x16x4xbf16> to vector<16x16x4xbf16>
      %17 = vector.shape_cast %16 : vector<16x16x4xbf16> to vector<256x4xbf16>
      %c0_16 = arith.constant 0 : index
      %c0_17 = arith.constant 0 : index
      %c2 = arith.constant 2 : index
      %c0_18 = arith.constant 0 : index
      %18 = vector.load %arg3[%c0_16, %c0_17, %c2, %c0_18] : memref<1x18x18x4xbf16, #tpu.memory_space<vmem>>, vector<1x16x16x4xbf16>
      %19 = vector.shape_cast %18 : vector<1x16x16x4xbf16> to vector<16x16x4xbf16>
      %20 = vector.shape_cast %19 : vector<16x16x4xbf16> to vector<256x4xbf16>
      %c0_19 = arith.constant 0 : index
      %c1_20 = arith.constant 1 : index
      %c0_21 = arith.constant 0 : index
      %c0_22 = arith.constant 0 : index
      %21 = vector.load %arg3[%c0_19, %c1_20, %c0_21, %c0_22] : memref<1x18x18x4xbf16, #tpu.memory_space<vmem>>, vector<1x16x16x4xbf16>
      %22 = vector.shape_cast %21 : vector<1x16x16x4xbf16> to vector<16x16x4xbf16>
      %23 = vector.shape_cast %22 : vector<16x16x4xbf16> to vector<256x4xbf16>
      %c0_23 = arith.constant 0 : index
      %c1_24 = arith.constant 1 : index
      %c1_25 = arith.constant 1 : index
      %c0_26 = arith.constant 0 : index
      %24 = vector.load %arg3[%c0_23, %c1_24, %c1_25, %c0_26] : memref<1x18x18x4xbf16, #tpu.memory_space<vmem>>, vector<1x16x16x4xbf16>
      %25 = vector.shape_cast %24 : vector<1x16x16x4xbf16> to vector<16x16x4xbf16>
      %26 = vector.shape_cast %25 : vector<16x16x4xbf16> to vector<256x4xbf16>
      %c0_27 = arith.constant 0 : index
      %c1_28 = arith.constant 1 : index
      %c2_29 = arith.constant 2 : index
      %c0_30 = arith.constant 0 : index
      %27 = vector.load %arg3[%c0_27, %c1_28, %c2_29, %c0_30] : memref<1x18x18x4xbf16, #tpu.memory_space<vmem>>, vector<1x16x16x4xbf16>
      %28 = vector.shape_cast %27 : vector<1x16x16x4xbf16> to vector<16x16x4xbf16>
      %29 = vector.shape_cast %28 : vector<16x16x4xbf16> to vector<256x4xbf16>
      %c0_31 = arith.constant 0 : index
      %c2_32 = arith.constant 2 : index
      %c0_33 = arith.constant 0 : index
      %c0_34 = arith.constant 0 : index
      %30 = vector.load %arg3[%c0_31, %c2_32, %c0_33, %c0_34] : memref<1x18x18x4xbf16, #tpu.memory_space<vmem>>, vector<1x16x16x4xbf16>
      %31 = vector.shape_cast %30 : vector<1x16x16x4xbf16> to vector<16x16x4xbf16>
      %32 = vector.shape_cast %31 : vector<16x16x4xbf16> to vector<256x4xbf16>
      %c0_35 = arith.constant 0 : index
      %c2_36 = arith.constant 2 : index
      %c1_37 = arith.constant 1 : index
      %c0_38 = arith.constant 0 : index
      %33 = vector.load %arg3[%c0_35, %c2_36, %c1_37, %c0_38] : memref<1x18x18x4xbf16, #tpu.memory_space<vmem>>, vector<1x16x16x4xbf16>
      %34 = vector.shape_cast %33 : vector<1x16x16x4xbf16> to vector<16x16x4xbf16>
      %35 = vector.shape_cast %34 : vector<16x16x4xbf16> to vector<256x4xbf16>
      %c0_39 = arith.constant 0 : index
      %c2_40 = arith.constant 2 : index
      %c2_41 = arith.constant 2 : index
      %c0_42 = arith.constant 0 : index
      %36 = vector.load %arg3[%c0_39, %c2_40, %c2_41, %c0_42] : memref<1x18x18x4xbf16, #tpu.memory_space<vmem>>, vector<1x16x16x4xbf16>
      %37 = vector.shape_cast %36 : vector<1x16x16x4xbf16> to vector<16x16x4xbf16>
      %38 = vector.shape_cast %37 : vector<16x16x4xbf16> to vector<256x4xbf16>
      %39 = tpu.concatenate %14, %17, %20, %23, %26, %29, %32, %35, %38 in 1 : vector<256x4xbf16>, vector<256x4xbf16>, vector<256x4xbf16>, vector<256x4xbf16>, vector<256x4xbf16>, vector<256x4xbf16>, vector<256x4xbf16>, vector<256x4xbf16>, vector<256x4xbf16> -> vector<256x36xbf16>
      %c0_43 = arith.constant 0 : index
      %c0_44 = arith.constant 0 : index
      %40 = vector.load %arg7[%c0_43, %c0_44] : memref<256x36xbf16, #tpu.memory_space<vmem>>, vector<256x36xbf16>
      tpu.vector_store %arg7[%c0_43, %c0_44], %39 {strides = array<i32>} : memref<256x36xbf16, #tpu.memory_space<vmem>>, vector<256x36xbf16>,
    } else {
    }
    %c0 = arith.constant 0 : index
    %c0_1 = arith.constant 0 : index
    %3 = vector.load %arg7[%c0, %c0_1] : memref<256x36xbf16, #tpu.memory_space<vmem>>, vector<256x36xbf16>
    %c0_2 = arith.constant 0 : index
    %c0_3 = arith.constant 0 : index
    %4 = vector.load %arg4[%c0_2, %c0_3] : memref<36x8xbf16, #tpu.memory_space<vmem>>, vector<36x8xbf16>
    %cst = arith.constant dense<0.000000e+00> : vector<256x8xf32>
    %5 = tpu.matmul %3, %4, %cst {dimension_numbers = #tpu.dot_dimension_numbers<[1], [0], [0], [1], [0, 0, 1, 1], [], []>} : vector<256x36xbf16>, vector<36x8xbf16>, vector<256x8xf32> -> vector<256x8xf32>
    %c0_4 = arith.constant 0 : index
    %c0_5 = arith.constant 0 : index
    %6 = vector.load %arg5[%c0_4, %c0_5] : memref<1x8xf32, #tpu.memory_space<vmem>>, vector<1x8xf32>
    %7 = vector.broadcast %6 : vector<1x8xf32> to vector<256x8xf32>
    %8 = arith.addf %5, %7 : vector<256x8xf32>
    %9 = tpu.transpose %8, [1, 0] : vector<256x8xf32> -> vector<8x256xf32>
    %10 = vector.shape_cast %9 : vector<8x256xf32> to vector<1x8x256xf32>
    %c0_6 = arith.constant 0 : index
    %c0_7 = arith.constant 0 : index
    %c0_8 = arith.constant 0 : index
    %11 = vector.load %arg6[%c0_6, %c0_7, %c0_8] : memref<1x8x256xf32, #tpu.memory_space<vmem>>, vector<1x8x256xf32>
    tpu.vector_store %arg6[%c0_6, %c0_7, %c0_8], %10 {strides = array<i32>} : memref<1x8x256xf32, #tpu.memory_space<vmem>>, vector<1x8x256xf32>,
    return
  }
  func.func @transform_0(%arg0: i32, %arg1: i32, %arg2: i32) -> (i32, i32, i32, i32) {
    %c1_i32 = arith.constant 1 : i32
    %0 = arith.muli %arg0, %c1_i32 : i32
    %1 = arith.addi %0, %arg1 : i32
    %c0_i32 = arith.constant 0 : i32
    %c0_i32_0 = arith.constant 0 : i32
    %c0_i32_1 = arith.constant 0 : i32
    %c0_i32_2 = arith.constant 0 : i32
    return %1, %c0_i32, %c0_i32_0, %c0_i32_1 : i32, i32, i32, i32
  }
  func.func @transform_1(%arg0: i32, %arg1: i32, %arg2: i32) -> (i32, i32) {
    %c0_i32 = arith.constant 0 : i32
    %c0_i32_0 = arith.constant 0 : i32
    return %c0_i32, %arg2 : i32, i32
  }
  func.func @transform_2(%arg0: i32, %arg1: i32, %arg2: i32) -> (i32, i32) {
    %c0_i32 = arith.constant 0 : i32
    %c0_i32_0 = arith.constant 0 : i32
    return %c0_i32, %arg2 : i32, i32
  }
  func.func @transform_3(%arg0: i32, %arg1: i32, %arg2: i32) -> (i32, i32, i32) {
    %c0_i32 = arith.constant 0 : i32
    return %arg0, %arg2, %arg1 : i32, i32, i32
  }
}

</mosaic_0001>

<llo_original>
// kernel: conv2d_block.1
$region0: #{conv2d_block.1}
  #allocation0 [shape = 'u32[]', space=smem, size = 0x4, offset = 0x4, fixed_abs, tag = 'smem constant byte address 0x4 - core index']
  #allocation1 [shape = 'u32[144,128]{1,0:T(1,128)}', space=vmem, size = 0x12000, scoped, tag = 'internal scratch']
  #allocation2 [shape = 'bf16[256,36]{1,0:T(16,128)(2,1)}', space=vmem, size = 0x10000, scoped, tag = 'scratch operand']
  %s0 = inlined_call_operand.vmem [shape: bf16[2,18,18,4], index: 0, kind: input, shape index: {}]
  %s1 = inlined_call_operand.vmem [shape: bf16[36,8], index: 1, kind: input, shape index: {}]
  %s2 = inlined_call_operand.vmem [shape: f32[1,8], index: 2, kind: input, shape index: {}]
  %s3 = inlined_call_operand.vmem [shape: f32[2,8,256], index: 3, kind: output, shape index: {}]
  %s4 = sld [smem:[#allocation0]]
  $region49: #{conv2d_block.1} parent=0
    _
  %s6 = ssub.s32 1, %s4
  %s7 = scalar_select 0, %s6, %s4
  loop: start=0, step=1, limit=4
  $region2: #{conv2d_block.1} parent=0 // loop_pre_header
    _
  $region3: #{conv2d_block.1} parent=0 // loop_header
    %s9 = sphi 0, %s13
    %p10 = scmp.ge.s32.totalorder %s9, 4
    %s16 = sphi 0, %s35
    %s17 = sphi 0, %s31
    %s18 = sphi 0, %s27
    %s19 = sphi 0, %s16
    %s20 = sphi 0, %s17
    %s21 = sphi 0, %s18
    %s22 = sphi 0, %s19
    %s23 = sphi 0, %s20
    %s24 = sphi 0, %s21
    %s40 = sphi 0, %s42
    %s43 = sphi 0, %s40
    %s44 = sphi 0, %s43
    %s60 = sphi 0, %s44
    %s66 = sphi 0, %s68
    %s69 = sphi 0, %s66
    %s70 = sphi 0, %s69
    %s86 = sphi 0, %s70
    %s92 = sphi 0, %s94
    %s95 = sphi 0, %s92
    %s96 = sphi 0, %s95
    %s112 = sphi 0, %s96
    %s122 = sphi 0, %s124
    %s125 = sphi 0, %s122
    %s126 = sphi 0, %s125
    %s142 = sphi 0, %s126
  $region4: #{conv2d_block.1} parent=0 // loop_header_branch
    %12 = sbr.rel (%p10) target = $region8
  $region5: #{conv2d_block.1} parent=0 // loop_body
    %s14 = ssub.s32 %s9, 1
    %s15 = ssub.s32 %s9, 2
    %s25 = sadd.s32 1, %s18
    %p26 = scmp.ge.s32.totalorder %s25, 1
    %s27 = scalar_select %p26, 0, %s25
    %s28 = sadd.s32 1, %s17
    %s29 = scalar_select %p26, %s28, %s17
    %p30 = scmp.ge.s32.totalorder %s29, 1
    %s31 = scalar_select %p30, 0, %s29
    %s32 = sadd.s32 1, %s16
    %s33 = scalar_select %p30, %s32, %s16
    %p34 = scmp.ge.s32.totalorder %s33, 2
    %s35 = scalar_select %p34, 0, %s33
    %s36 = sadd.s32 %s16, %s17
    %s37 = sadd.s32 %s35, %s31
    %s38 = ssub.s32 %s36, %s37
    %p39 = scmp.eq.s32.totalorder %s38, 0
    %s41 = sadd.s32 %s40, 1
    %s42 = scalar_select %p39, %s40, %s41
    %p45 = pneg %p39
    %p46 = scmp.eq.s32.totalorder %s9, 1
    %p47 = por %p45, %p46
    %p48 = scmp.ne.s32.totalorder %s40, %s43
    %p49 = scmp.eq.s32.totalorder %s9, 0
    %p50 = por %p48, %p49
    %p51 = scmp.ne.s32.totalorder %s40, %s43
    %p52 = scmp.eq.s32.totalorder %s14, 1
    %p53 = por %p51, %p52
    %p54 = scmp.ne.s32.totalorder %s43, %s44
    %p55 = scmp.eq.s32.totalorder %s14, 0
    %p56 = por %p54, %p55
    %p57 = scmp.ne.s32.totalorder %s43, %s44
    %p58 = scmp.eq.s32.totalorder %s15, 1
    %p59 = por %p57, %p58
    %p61 = scmp.ne.s32.totalorder %s44, %s60
    %p62 = scmp.eq.s32.totalorder %s15, 0
    %p63 = por %p61, %p62
    %s64 = ssub.s32 %s18, %s27
    %p65 = scmp.eq.s32.totalorder %s64, 0
    %s67 = sadd.s32 %s66, 1
    %s68 = scalar_select %p65, %s66, %s67
    %p71 = pneg %p65
    %p72 = scmp.eq.s32.totalorder %s9, 1
    %p73 = por %p71, %p72
    %p74 = scmp.ne.s32.totalorder %s66, %s69
    %p75 = scmp.eq.s32.totalorder %s9, 0
    %p76 = por %p74, %p75
    %p77 = scmp.ne.s32.totalorder %s66, %s69
    %p78 = scmp.eq.s32.totalorder %s14, 1
    %p79 = por %p77, %p78
    %p80 = scmp.ne.s32.totalorder %s69, %s70
    %p81 = scmp.eq.s32.totalorder %s14, 0
    %p82 = por %p80, %p81
    %p83 = scmp.ne.s32.totalorder %s69, %s70
    %p84 = scmp.eq.s32.totalorder %s15, 1
    %p85 = por %p83, %p84
    %p87 = scmp.ne.s32.totalorder %s70, %s86
    %p88 = scmp.eq.s32.totalorder %s15, 0
    %p89 = por %p87, %p88
    %s90 = ssub.s32 %s18, %s27
    %p91 = scmp.eq.s32.totalorder %s90, 0
    %s93 = sadd.s32 %s92, 1
    %s94 = scalar_select %p91, %s92, %s93
    %p97 = pneg %p91
    %p98 = scmp.eq.s32.totalorder %s9, 1
    %p99 = por %p97, %p98
    %p100 = scmp.ne.s32.totalorder %s92, %s95
    %p101 = scmp.eq.s32.totalorder %s9, 0
    %p102 = por %p100, %p101
    %p103 = scmp.ne.s32.totalorder %s92, %s95
    %p104 = scmp.eq.s32.totalorder %s14, 1
    %p105 = por %p103, %p104
    %p106 = scmp.ne.s32.totalorder %s95, %s96
    %p107 = scmp.eq.s32.totalorder %s14, 0
    %p108 = por %p106, %p107
    %p109 = scmp.ne.s32.totalorder %s95, %s96
    %p110 = scmp.eq.s32.totalorder %s15, 1
    %p111 = por %p109, %p110
    %p113 = scmp.ne.s32.totalorder %s96, %s112
    %p114 = scmp.eq.s32.totalorder %s15, 0
    %p115 = por %p113, %p114
    %s116 = ssub.s32 %s16, %s35
    %s117 = ssub.s32 %s18, %s27
    %s118 = sor.u32 %s116, %s117
    %s119 = ssub.s32 %s17, %s31
    %s120 = sor.u32 %s118, %s119
    %p121 = scmp.eq.s32.totalorder %s120, 0
    %s123 = sadd.s32 %s122, 1
    %s124 = scalar_select %p121, %s122, %s123
    %p127 = pneg %p121
    %p128 = scmp.eq.s32.totalorder %s9, 1
    %p129 = por %p127, %p128
    %p130 = scmp.ne.s32.totalorder %s122, %s125
    %p131 = scmp.eq.s32.totalorder %s9, 0
    %p132 = por %p130, %p131
    %p133 = scmp.ne.s32.totalorder %s122, %s125
    %p134 = scmp.eq.s32.totalorder %s14, 1
    %p135 = por %p133, %p134
    %p136 = scmp.ne.s32.totalorder %s125, %s126
    %p137 = scmp.eq.s32.totalorder %s14, 0
    %p138 = por %p136, %p137
    %p139 = scmp.ne.s32.totalorder %s125, %s126
    %p140 = scmp.eq.s32.totalorder %s15, 1
    %p141 = por %p139, %p140
    %p143 = scmp.ne.s32.totalorder %s126, %s142
    %p144 = scmp.eq.s32.totalorder %s15, 0
    %p145 = por %p143, %p144
    %p146 = scmp.le.s32.totalorder 1, %s9
    %p147 = scmp.lt.s32.totalorder %s9, 3
    %p148 = pnand %p146, %p147
    %p149 = pneg %p148
    // Predicated region
    $region9: #{conv2d_block.1} parent=5 // pred_check
      _
    $region10: #{conv2d_block.1} parent=5 // pred_check_branch
      %151 = sbr.rel (%p148) target = $region12
    $region11: #{conv2d_block.1} parent=5 // pred_region
      %s152 = ssub.s32 %s9, 1
      // Predicated region
      $region13: #{conv2d_block.1} parent=11 // pred_check
        %p153 = pneg %p82
      $region14: #{conv2d_block.1} parent=11 // pred_check_branch
        %155 = sbr.rel (%p153) target = $region16
      $region15: #{conv2d_block.1} parent=11 // pred_region
        %p156 = scmp.lt.s32.totalorder %s21, 0
        %s157 = scalar_select %p156, %s21, 0
        %s158 = smul.addr %s157, 4
        %s159 = scalar_lea.vmem %s1, %s158
      $region16: #{conv2d_block.1} parent=11 // pred_fallthru
        _
      // Predicated region
      $region17: #{conv2d_block.1} parent=11 // pred_check
        %p160 = pneg %p108
      $region18: #{conv2d_block.1} parent=11 // pred_check_branch
        %162 = sbr.rel (%p160) target = $region20
      $region19: #{conv2d_block.1} parent=11 // pred_region
        %p163 = scmp.lt.s32.totalorder %s21, 0
        %s164 = scalar_select %p163, %s21, 0
        %s165 = scalar_lea.vmem %s2, %s164
      $region20: #{conv2d_block.1} parent=11 // pred_fallthru
        _
    $region12: #{conv2d_block.1} parent=5 // pred_fallthru
      _
    %p166 = scmp.lt.s32.totalorder %s9, 2
    // Predicated region
    $region21: #{conv2d_block.1} parent=5 // pred_check
      %p167 = pneg %p166
    $region22: #{conv2d_block.1} parent=5 // pred_check_branch
      %169 = sbr.rel (%p167) target = $region24
    $region23: #{conv2d_block.1} parent=5 // pred_region
      // Predicated region
      $region25: #{conv2d_block.1} parent=23 // pred_check
        %p170 = pneg %p50
      $region26: #{conv2d_block.1} parent=23 // pred_check_branch
        %172 = sbr.rel (%p170) target = $region28
      $region27: #{conv2d_block.1} parent=23 // pred_region
        %s173 = sadd.s32 %s16, %s17
        %p174 = scmp.lt.s32.totalorder %s173, 1
        %s175 = scalar_select %p174, %s173, 1
        %s176 = smul.addr %s175, 54
        %s177 = smul.addr %s176, 4
        %s178 = scalar_lea.vmem %s0, %s177
        %s179 = sadd.s32 %s16, %s17
      $region28: #{conv2d_block.1} parent=23 // pred_fallthru
        _
    $region24: #{conv2d_block.1} parent=5 // pred_fallthru
      _
    %p180 = scmp.le.s32.totalorder 1, %s9
    %p181 = scmp.lt.s32.totalorder %s9, 3
    %p182 = pnand %p180, %p181
    %p183 = pneg %p182
    // Predicated region
    $region29: #{conv2d_block.1} parent=5 // pred_check
      _
    $region30: #{conv2d_block.1} parent=5 // pred_check_branch
      %185 = sbr.rel (%p182) target = $region32
    $region31: #{conv2d_block.1} parent=5 // pred_region
      %s186 = ssub.s32 %s9, 1
      %s187 = sadd.s32 %s19, %s20
      %p188 = scmp.lt.s32.totalorder %s187, 1
      %s189 = scalar_select %p188, %s187, 1
      %s190 = smul.addr %s189, 54
      %s191 = smul.addr %s190, 4
      %s192 = scalar_lea.vmem %s0, %s191
      %p193 = pneg %p56
      %p194 = pneg %p53
      %p195 = scmp.lt.s32.totalorder %s21, 0
      %s196 = scalar_select %p195, %s21, 0
      %s197 = smul.addr %s196, 4
      %s198 = scalar_lea.vmem %s1, %s197
      %p199 = pneg %p82
      %p200 = pneg %p79
      %p201 = scmp.lt.s32.totalorder %s21, 0
      %s202 = scalar_select %p201, %s21, 0
      %s203 = scalar_lea.vmem %s2, %s202
      %p204 = pneg %p108
      %p205 = pneg %p105
      %p206 = pneg %p138
      %p207 = pneg %p135
      %s208 = smul.u32 2, %s20
      %p209 = scmp.lt.s32.totalorder %s19, 1
      %s210 = scalar_select %p209, %s19, 1
      %p211 = scmp.lt.s32.totalorder %s21, 0
      %s212 = scalar_select %p211, %s21, 0
      %p213 = scmp.lt.s32.totalorder %s208, 1
      %s214 = scalar_select %p213, %s208, 1
      %s215 = smul.addr %s212, 2
      %s216 = sadd.s32 %s214, %s215
      %s217 = smul.addr %s210, 2
      %s218 = sadd.s32 %s216, %s217
      %s219 = smul.addr %s218, 8
      %s220 = scalar_lea.vmem %s3, %s219
      %s221 = sadd.s32 %s19, %s20
      %p222 = scmp.lt.s32.totalorder %s221, 1
      %s223 = scalar_select %p222, %s221, 1
      %s224 = smul.addr %s223, 54
      %s225 = smul.addr %s224, 4
      %s226 = scalar_lea.vmem %s0, %s225
      %s227 = sadd.s32 %s19, %s20
      %p228 = scmp.lt.s32.totalorder %s21, 0
      %s229 = scalar_select %p228, %s21, 0
      %s230 = smul.addr %s229, 4
      %s231 = scalar_lea.vmem %s1, %s230
      %p232 = scmp.lt.s32.totalorder %s21, 0
      %s233 = scalar_select %p232, %s21, 0
      %s234 = scalar_lea.vmem %s2, %s233
      %s235 = smul.u32 2, %s20
      %p236 = scmp.lt.s32.totalorder %s19, 1
      %s237 = scalar_select %p236, %s19, 1
      %p238 = scmp.lt.s32.totalorder %s21, 0
      %s239 = scalar_select %p238, %s21, 0
      %p240 = scmp.lt.s32.totalorder %s235, 1
      %s241 = scalar_select %p240, %s235, 1
      %s242 = smul.addr %s239, 2
      %s243 = sadd.s32 %s241, %s242
      %s244 = smul.addr %s237, 2
      %s245 = sadd.s32 %s243, %s244
      %s246 = smul.addr %s245, 8
      %s247 = scalar_lea.vmem %s3, %s246
      %s248 = smul.u32 2, %s20
      %p250 = scmp.eq.s32.totalorder %s21, 0
      // Predicated region
      $region33: #{conv2d_block.1} parent=31 // pred_check
        %p251 = pneg %p250
      $region34: #{conv2d_block.1} parent=31 // pred_check_branch
        %253 = sbr.rel (%p251) target = $region36
      $region35: #{conv2d_block.1} parent=31 // pred_region
        %v254 = vld [vmem:[%s226] sm:$0xf]
        %v255 = vld [vmem:[%s226 + $0x4] sm:$0xf]
        %v256 = vld [vmem:[%s226 + $0xc] sm:$0xf]
        %v257 = vld [vmem:[%s226 + $0x10] sm:$0xf]
        %v258 = vld [vmem:[%s226 + $0x18] sm:$0xf]
        %v259 = vld [vmem:[%s226 + $0x1c] sm:$0xf]
        %v260 = vld [vmem:[%s226 + $0x24] sm:$0xf]
        %v261 = vld [vmem:[%s226 + $0x28] sm:$0xf]
        %v262 = vld [vmem:[%s226 + $0x30] sm:$0xf]
        %v263 = vld [vmem:[%s226 + $0x34] sm:$0xf]
        %v264 = vld [vmem:[%s226 + $0x3c] sm:$0xf]
        %v265 = vld [vmem:[%s226 + $0x40] sm:$0xf]
        %v266 = vld [vmem:[%s226 + $0x48] sm:$0xf]
        %v267 = vld [vmem:[%s226 + $0x4c] sm:$0xf]
        %v268 = vld [vmem:[%s226 + $0x54] sm:$0xf]
        %v269 = vld [vmem:[%s226 + $0x58] sm:$0xf]
        %v270 = vld [vmem:[%s226 + $0x60] sm:$0xf]
        %v271 = vld [vmem:[%s226 + $0x64] sm:$0xf]
        %v272 = vld [vmem:[%s226 + $0x6c] sm:$0xf]
        %v273 = vld [vmem:[%s226 + $0x70] sm:$0xf]
        %v274 = vld [vmem:[%s226 + $0x78] sm:$0xf]
        %v275 = vld [vmem:[%s226 + $0x7c] sm:$0xf]
        %v276 = vld [vmem:[%s226 + $0x84] sm:$0xf]
        %v277 = vld [vmem:[%s226 + $0x88] sm:$0xf]
        %v278 = vld [vmem:[%s226 + $0x90] sm:$0xf]
        %v279 = vld [vmem:[%s226 + $0x94] sm:$0xf]
        %v280 = vld [vmem:[%s226 + $0x9c] sm:$0xf]
        %v281 = vld [vmem:[%s226 + $0xa0] sm:$0xf]
        %v282 = vld [vmem:[%s226 + $0xa8] sm:$0xf]
        %v283 = vld [vmem:[%s226 + $0xac] sm:$0xf]
        %v284 = vld [vmem:[%s226 + $0xb4] sm:$0xf]
        %v285 = vld [vmem:[%s226 + $0xb8] sm:$0xf]
        %v286 = vld [vmem:[%s226 + $0x8] sm:$0x1]
        %v287 = vld [vmem:[%s226 + $0x14] sm:$0x1]
        %v288 = vld [vmem:[%s226 + $0x20] sm:$0x1]
        %v289 = vld [vmem:[%s226 + $0x2c] sm:$0x1]
        %v290 = vld [vmem:[%s226 + $0x38] sm:$0x1]
        %v291 = vld [vmem:[%s226 + $0x44] sm:$0x1]
        %v292 = vld [vmem:[%s226 + $0x50] sm:$0x1]
        %v293 = vld [vmem:[%s226 + $0x5c] sm:$0x1]
        %v294 = vld [vmem:[%s226 + $0x68] sm:$0x1]
        %v295 = vld [vmem:[%s226 + $0x74] sm:$0x1]
        %v296 = vld [vmem:[%s226 + $0x80] sm:$0x1]
        %v297 = vld [vmem:[%s226 + $0x8c] sm:$0x1]
        %v298 = vld [vmem:[%s226 + $0x98] sm:$0x1]
        %v299 = vld [vmem:[%s226 + $0xa4] sm:$0x1]
        %v300 = vld [vmem:[%s226 + $0xb0] sm:$0x1]
        %v301 = vld [vmem:[%s226 + $0xbc] sm:$0x1]
        %vm302 = vsmask.f32 3328
        %vm303 = vsmask.f32 7440
        %vm304 = vmor %vm302, %vm303
        %v306 = vshrl.u32 %v254, 16
        %v308 = vrot.slane %v306, 4
        %v309 = vshll.u32 %v254, 16
        %v311 = vrot.slane %v309, 5
        %v312 = vor.u32 %v308, %v311
        %v313 = vrot.slane %v312, 4
        %v315 = vshll.u32 %v255, 16
        %v317 = vrot.slane %v315, 5
        %v318 = vsel %vm304, %v313, %v317
        %v319 = vshrl.u32 %v255, 16
        %v321 = vrot.slane %v319, 4
        %v322 = vor.u32 %v321, %v317
        %v323 = vrot.slane %v322, 4
        %v325 = vshll.u32 %v286, 16
        %v327 = vrot.slane %v325, 5
        %v328 = vsel %vm304, %v323, %v327
        %v330 = vshrl.u32 %v256, 16
        %v332 = vrot.slane %v330, 4
        %v333 = vshll.u32 %v256, 16
        %v335 = vrot.slane %v333, 5
        %v336 = vor.u32 %v332, %v335
        %v337 = vrot.slane %v336, 4
        %v339 = vshll.u32 %v257, 16
        %v341 = vrot.slane %v339, 5
        %v342 = vsel %vm304, %v337, %v341
        %v343 = vshrl.u32 %v257, 16
        %v345 = vrot.slane %v343, 4
        %v346 = vor.u32 %v345, %v341
        %v347 = vrot.slane %v346, 4
        %v349 = vshll.u32 %v287, 16
        %v351 = vrot.slane %v349, 5
        %v352 = vsel %vm304, %v347, %v351
        %v354 = vshrl.u32 %v258, 16
        %v356 = vrot.slane %v354, 4
        %v357 = vshll.u32 %v258, 16
        %v359 = vrot.slane %v357, 5
        %v360 = vor.u32 %v356, %v359
        %v361 = vrot.slane %v360, 4
        %v363 = vshll.u32 %v259, 16
        %v365 = vrot.slane %v363, 5
        %v366 = vsel %vm304, %v361, %v365
        %v367 = vshrl.u32 %v259, 16
        %v369 = vrot.slane %v367, 4
        %v370 = vor.u32 %v369, %v365
        %v371 = vrot.slane %v370, 4
        %v373 = vshll.u32 %v288, 16
        %v375 = vrot.slane %v373, 5
        %v376 = vsel %vm304, %v371, %v375
        %v378 = vshrl.u32 %v260, 16
        %v380 = vrot.slane %v378, 4
        %v381 = vshll.u32 %v260, 16
        %v383 = vrot.slane %v381, 5
        %v384 = vor.u32 %v380, %v383
        %v385 = vrot.slane %v384, 4
        %v387 = vshll.u32 %v261, 16
        %v389 = vrot.slane %v387, 5
        %v390 = vsel %vm304, %v385, %v389
        %v391 = vshrl.u32 %v261, 16
        %v393 = vrot.slane %v391, 4
        %v394 = vor.u32 %v393, %v389
        %v395 = vrot.slane %v394, 4
        %v397 = vshll.u32 %v289, 16
        %v399 = vrot.slane %v397, 5
        %v400 = vsel %vm304, %v395, %v399
        %v402 = vshrl.u32 %v262, 16
        %v404 = vrot.slane %v402, 4
        %v405 = vshll.u32 %v262, 16
        %v407 = vrot.slane %v405, 5
        %v408 = vor.u32 %v404, %v407
        %v409 = vrot.slane %v408, 4
        %v411 = vshll.u32 %v263, 16
        %v413 = vrot.slane %v411, 5
        %v414 = vsel %vm304, %v409, %v413
        %v415 = vshrl.u32 %v263, 16
        %v417 = vrot.slane %v415, 4
        %v418 = vor.u32 %v417, %v413
        %v419 = vrot.slane %v418, 4
        %v421 = vshll.u32 %v290, 16
        %v423 = vrot.slane %v421, 5
        %v424 = vsel %vm304, %v419, %v423
        %v426 = vshrl.u32 %v264, 16
        %v428 = vrot.slane %v426, 4
        %v429 = vshll.u32 %v264, 16
        %v431 = vrot.slane %v429, 5
        %v432 = vor.u32 %v428, %v431
        %v433 = vrot.slane %v432, 4
        %v435 = vshll.u32 %v265, 16
        %v437 = vrot.slane %v435, 5
        %v438 = vsel %vm304, %v433, %v437
        %v439 = vshrl.u32 %v265, 16
        %v441 = vrot.slane %v439, 4
        %v442 = vor.u32 %v441, %v437
        %v443 = vrot.slane %v442, 4
        %v445 = vshll.u32 %v291, 16
        %v447 = vrot.slane %v445, 5
        %v448 = vsel %vm304, %v443, %v447
        %v450 = vshrl.u32 %v266, 16
        %v452 = vrot.slane %v450, 4
        %v453 = vshll.u32 %v266, 16
        %v455 = vrot.slane %v453, 5
        %v456 = vor.u32 %v452, %v455
        %v457 = vrot.slane %v456, 4
        %v459 = vshll.u32 %v267, 16
        %v461 = vrot.slane %v459, 5
        %v462 = vsel %vm304, %v457, %v461
        %v463 = vshrl.u32 %v267, 16
        %v465 = vrot.slane %v463, 4
        %v466 = vor.u32 %v465, %v461
        %v467 = vrot.slane %v466, 4
        %v469 = vshll.u32 %v292, 16
        %v471 = vrot.slane %v469, 5
        %v472 = vsel %vm304, %v467, %v471
        %v474 = vshrl.u32 %v268, 16
        %v476 = vrot.slane %v474, 4
        %v477 = vshll.u32 %v268, 16
        %v479 = vrot.slane %v477, 5
        %v480 = vor.u32 %v476, %v479
        %v481 = vrot.slane %v480, 4
        %v483 = vshll.u32 %v269, 16
        %v485 = vrot.slane %v483, 5
        %v486 = vsel %vm304, %v481, %v485
        %v487 = vshrl.u32 %v269, 16
        %v489 = vrot.slane %v487, 4
        %v490 = vor.u32 %v489, %v485
        %v491 = vrot.slane %v490, 4
        %v493 = vshll.u32 %v293, 16
        %v495 = vrot.slane %v493, 5
        %v496 = vsel %vm304, %v491, %v495
        %v498 = vshrl.u32 %v270, 16
        %v500 = vrot.slane %v498, 4
        %v501 = vshll.u32 %v270, 16
        %v503 = vrot.slane %v501, 5
        %v504 = vor.u32 %v500, %v503
        %v505 = vrot.slane %v504, 4
        %v507 = vshll.u32 %v271, 16
        %v509 = vrot.slane %v507, 5
        %v510 = vsel %vm304, %v505, %v509
        %v511 = vshrl.u32 %v271, 16
        %v513 = vrot.slane %v511, 4
        %v514 = vor.u32 %v513, %v509
        %v515 = vrot.slane %v514, 4
        %v517 = vshll.u32 %v294, 16
        %v519 = vrot.slane %v517, 5
        %v520 = vsel %vm304, %v515, %v519
        %v522 = vshrl.u32 %v272, 16
        %v524 = vrot.slane %v522, 4
        %v525 = vshll.u32 %v272, 16
        %v527 = vrot.slane %v525, 5
        %v528 = vor.u32 %v524, %v527
        %v529 = vrot.slane %v528, 4
        %v531 = vshll.u32 %v273, 16
        %v533 = vrot.slane %v531, 5
        %v534 = vsel %vm304, %v529, %v533
        %v535 = vshrl.u32 %v273, 16
        %v537 = vrot.slane %v535, 4
        %v538 = vor.u32 %v537, %v533
        %v539 = vrot.slane %v538, 4
        %v541 = vshll.u32 %v295, 16
        %v543 = vrot.slane %v541, 5
        %v544 = vsel %vm304, %v539, %v543
        %v546 = vshrl.u32 %v274, 16
        %v548 = vrot.slane %v546, 4
        %v549 = vshll.u32 %v274, 16
        %v551 = vrot.slane %v549, 5
        %v552 = vor.u32 %v548, %v551
        %v553 = vrot.slane %v552, 4
        %v555 = vshll.u32 %v275, 16
        %v557 = vrot.slane %v555, 5
        %v558 = vsel %vm304, %v553, %v557
        %v559 = vshrl.u32 %v275, 16
        %v561 = vrot.slane %v559, 4
        %v562 = vor.u32 %v561, %v557
        %v563 = vrot.slane %v562, 4
        %v565 = vshll.u32 %v296, 16
        %v567 = vrot.slane %v565, 5
        %v568 = vsel %vm304, %v563, %v567
        %v570 = vshrl.u32 %v276, 16
        %v572 = vrot.slane %v570, 4
        %v573 = vshll.u32 %v276, 16
        %v575 = vrot.slane %v573, 5
        %v576 = vor.u32 %v572, %v575
        %v577 = vrot.slane %v576, 4
        %v579 = vshll.u32 %v277, 16
        %v581 = vrot.slane %v579, 5
        %v582 = vsel %vm304, %v577, %v581
        %v583 = vshrl.u32 %v277, 16
        %v585 = vrot.slane %v583, 4
        %v586 = vor.u32 %v585, %v581
        %v587 = vrot.slane %v586, 4
        %v589 = vshll.u32 %v297, 16
        %v591 = vrot.slane %v589, 5
        %v592 = vsel %vm304, %v587, %v591
        %v594 = vshrl.u32 %v278, 16
        %v596 = vrot.slane %v594, 4
        %v597 = vshll.u32 %v278, 16
        %v599 = vrot.slane %v597, 5
        %v600 = vor.u32 %v596, %v599
        %v601 = vrot.slane %v600, 4
        %v603 = vshll.u32 %v279, 16
        %v605 = vrot.slane %v603, 5
        %v606 = vsel %vm304, %v601, %v605
        %v607 = vshrl.u32 %v279, 16
        %v609 = vrot.slane %v607, 4
        %v610 = vor.u32 %v609, %v605
        %v611 = vrot.slane %v610, 4
        %v613 = vshll.u32 %v298, 16
        %v615 = vrot.slane %v613, 5
        %v616 = vsel %vm304, %v611, %v615
        %v618 = vshrl.u32 %v280, 16
        %v620 = vrot.slane %v618, 4
        %v621 = vshll.u32 %v280, 16
        %v623 = vrot.slane %v621, 5
        %v624 = vor.u32 %v620, %v623
        %v625 = vrot.slane %v624, 4
        %v627 = vshll.u32 %v281, 16
        %v629 = vrot.slane %v627, 5
        %v630 = vsel %vm304, %v625, %v629
        %v631 = vshrl.u32 %v281, 16
        %v633 = vrot.slane %v631, 4
        %v634 = vor.u32 %v633, %v629
        %v635 = vrot.slane %v634, 4
        %v637 = vshll.u32 %v299, 16
        %v639 = vrot.slane %v637, 5
        %v640 = vsel %vm304, %v635, %v639
        %v642 = vshrl.u32 %v282, 16
        %v644 = vrot.slane %v642, 4
        %v645 = vshll.u32 %v282, 16
        %v647 = vrot.slane %v645, 5
        %v648 = vor.u32 %v644, %v647
        %v649 = vrot.slane %v648, 4
        %v651 = vshll.u32 %v283, 16
        %v653 = vrot.slane %v651, 5
        %v654 = vsel %vm304, %v649, %v653
        %v655 = vshrl.u32 %v283, 16
        %v657 = vrot.slane %v655, 4
        %v658 = vor.u32 %v657, %v653
        %v659 = vrot.slane %v658, 4
        %v661 = vshll.u32 %v300, 16
        %v663 = vrot.slane %v661, 5
        %v664 = vsel %vm304, %v659, %v663
        %v666 = vshrl.u32 %v284, 16
        %v668 = vrot.slane %v666, 4
        %v669 = vshll.u32 %v284, 16
        %v671 = vrot.slane %v669, 5
        %v672 = vor.u32 %v668, %v671
        %v673 = vrot.slane %v672, 4
        %v675 = vshll.u32 %v285, 16
        %v677 = vrot.slane %v675, 5
        %v678 = vsel %vm304, %v673, %v677
        %v679 = vshrl.u32 %v285, 16
        %v681 = vrot.slane %v679, 4
        %v682 = vor.u32 %v681, %v677
        %v683 = vrot.slane %v682, 4
        %v685 = vshll.u32 %v301, 16
        %v687 = vrot.slane %v685, 5
        %v688 = vsel %vm304, %v683, %v687
        %v689 = vld [vmem:[%s226] sm:$0xe]
        %v690 = vld [vmem:[%s226 + $0xc] sm:$0xe]
        %v691 = vld [vmem:[%s226 + $0x18] sm:$0xe]
        %v692 = vld [vmem:[%s226 + $0x24] sm:$0xe]
        %v693 = vld [vmem:[%s226 + $0x30] sm:$0xe]
        %v694 = vld [vmem:[%s226 + $0x3c] sm:$0xe]
        %v695 = vld [vmem:[%s226 + $0x48] sm:$0xe]
        %v696 = vld [vmem:[%s226 + $0x54] sm:$0xe]
        %v697 = vld [vmem:[%s226 + $0x60] sm:$0xe]
        %v698 = vld [vmem:[%s226 + $0x6c] sm:$0xe]
        %v699 = vld [vmem:[%s226 + $0x78] sm:$0xe]
        %v700 = vld [vmem:[%s226 + $0x84] sm:$0xe]
        %v701 = vld [vmem:[%s226 + $0x90] sm:$0xe]
        %v702 = vld [vmem:[%s226 + $0x9c] sm:$0xe]
        %v703 = vld [vmem:[%s226 + $0xa8] sm:$0xe]
        %v704 = vld [vmem:[%s226 + $0xb4] sm:$0xe]
        %vm753 = vcmask 1042432
        %vm754 = vcmask 1046532
        %vm755 = vmor %vm753, %vm754
        %v756 = vrot.slane %v689, 5
        %v757 = vrot.slane %v756, 4
        %v758 = vrot.slane %v255, 5
        %v759 = vsel %vm755, %v757, %v758
        %v760 = vrot.slane %v758, 4
        %v761 = vrot.slane %v286, 5
        %v762 = vsel %vm755, %v760, %v761
        %v763 = vrot.slane %v690, 5
        %v764 = vrot.slane %v763, 4
        %v765 = vrot.slane %v257, 5
        %v766 = vsel %vm755, %v764, %v765
        %v767 = vrot.slane %v765, 4
        %v768 = vrot.slane %v287, 5
        %v769 = vsel %vm755, %v767, %v768
        %v770 = vrot.slane %v691, 5
        %v771 = vrot.slane %v770, 4
        %v772 = vrot.slane %v259, 5
        %v773 = vsel %vm755, %v771, %v772
        %v774 = vrot.slane %v772, 4
        %v775 = vrot.slane %v288, 5
        %v776 = vsel %vm755, %v774, %v775
        %v777 = vrot.slane %v692, 5
        %v778 = vrot.slane %v777, 4
        %v779 = vrot.slane %v261, 5
        %v780 = vsel %vm755, %v778, %v779
        %v781 = vrot.slane %v779, 4
        %v782 = vrot.slane %v289, 5
        %v783 = vsel %vm755, %v781, %v782
        %v784 = vrot.slane %v693, 5
        %v785 = vrot.slane %v784, 4
        %v786 = vrot.slane %v263, 5
        %v787 = vsel %vm755, %v785, %v786
        %v788 = vrot.slane %v786, 4
        %v789 = vrot.slane %v290, 5
        %v790 = vsel %vm755, %v788, %v789
        %v791 = vrot.slane %v694, 5
        %v792 = vrot.slane %v791, 4
        %v793 = vrot.slane %v265, 5
        %v794 = vsel %vm755, %v792, %v793
        %v795 = vrot.slane %v793, 4
        %v796 = vrot.slane %v291, 5
        %v797 = vsel %vm755, %v795, %v796
        %v798 = vrot.slane %v695, 5
        %v799 = vrot.slane %v798, 4
        %v800 = vrot.slane %v267, 5
        %v801 = vsel %vm755, %v799, %v800
        %v802 = vrot.slane %v800, 4
        %v803 = vrot.slane %v292, 5
        %v804 = vsel %vm755, %v802, %v803
        %v805 = vrot.slane %v696, 5
        %v806 = vrot.slane %v805, 4
        %v807 = vrot.slane %v269, 5
        %v808 = vsel %vm755, %v806, %v807
        %v809 = vrot.slane %v807, 4
        %v810 = vrot.slane %v293, 5
        %v811 = vsel %vm755, %v809, %v810
        %v812 = vrot.slane %v697, 5
        %v813 = vrot.slane %v812, 4
        %v814 = vrot.slane %v271, 5
        %v815 = vsel %vm755, %v813, %v814
        %v816 = vrot.slane %v814, 4
        %v817 = vrot.slane %v294, 5
        %v818 = vsel %vm755, %v816, %v817
        %v819 = vrot.slane %v698, 5
        %v820 = vrot.slane %v819, 4
        %v821 = vrot.slane %v273, 5
        %v822 = vsel %vm755, %v820, %v821
        %v823 = vrot.slane %v821, 4
        %v824 = vrot.slane %v295, 5
        %v825 = vsel %vm755, %v823, %v824
        %v826 = vrot.slane %v699, 5
        %v827 = vrot.slane %v826, 4
        %v828 = vrot.slane %v275, 5
        %v829 = vsel %vm755, %v827, %v828
        %v830 = vrot.slane %v828, 4
        %v831 = vrot.slane %v296, 5
        %v832 = vsel %vm755, %v830, %v831
        %v833 = vrot.slane %v700, 5
        %v834 = vrot.slane %v833, 4
        %v835 = vrot.slane %v277, 5
        %v836 = vsel %vm755, %v834, %v835
        %v837 = vrot.slane %v835, 4
        %v838 = vrot.slane %v297, 5
        %v839 = vsel %vm755, %v837, %v838
        %v840 = vrot.slane %v701, 5
        %v841 = vrot.slane %v840, 4
        %v842 = vrot.slane %v279, 5
        %v843 = vsel %vm755, %v841, %v842
        %v844 = vrot.slane %v842, 4
        %v845 = vrot.slane %v298, 5
        %v846 = vsel %vm755, %v844, %v845
        %v847 = vrot.slane %v702, 5
        %v848 = vrot.slane %v847, 4
        %v849 = vrot.slane %v281, 5
        %v850 = vsel %vm755, %v848, %v849
        %v851 = vrot.slane %v849, 4
        %v852 = vrot.slane %v299, 5
        %v853 = vsel %vm755, %v851, %v852
        %v854 = vrot.slane %v703, 5
        %v855 = vrot.slane %v854, 4
        %v856 = vrot.slane %v283, 5
        %v857 = vsel %vm755, %v855, %v856
        %v858 = vrot.slane %v856, 4
        %v859 = vrot.slane %v300, 5
        %v860 = vsel %vm755, %v858, %v859
        %v861 = vrot.slane %v704, 5
        %v862 = vrot.slane %v861, 4
        %v863 = vrot.slane %v285, 5
        %v864 = vsel %vm755, %v862, %v863
        %v865 = vrot.slane %v863, 4
        %v866 = vrot.slane %v301, 5
        %v867 = vsel %vm755, %v865, %v866
        %s868 = scalar_lea.vmem %s226, 12
        %v869 = vld [vmem:[%s868] sm:$0xf]
        %v870 = vld [vmem:[%s868 + $0x4] sm:$0xf]
        %v871 = vld [vmem:[%s868 + $0xc] sm:$0xf]
        %v872 = vld [vmem:[%s868 + $0x10] sm:$0xf]
        %v873 = vld [vmem:[%s868 + $0x18] sm:$0xf]
        %v874 = vld [vmem:[%s868 + $0x1c] sm:$0xf]
        %v875 = vld [vmem:[%s868 + $0x24] sm:$0xf]
        %v876 = vld [vmem:[%s868 + $0x28] sm:$0xf]
        %v877 = vld [vmem:[%s868 + $0x30] sm:$0xf]
        %v878 = vld [vmem:[%s868 + $0x34] sm:$0xf]
        %v879 = vld [vmem:[%s868 + $0x3c] sm:$0xf]
        %v880 = vld [vmem:[%s868 + $0x40] sm:$0xf]
        %v881 = vld [vmem:[%s868 + $0x48] sm:$0xf]
        %v882 = vld [vmem:[%s868 + $0x4c] sm:$0xf]
        %v883 = vld [vmem:[%s868 + $0x54] sm:$0xf]
        %v884 = vld [vmem:[%s868 + $0x58] sm:$0xf]
        %v885 = vld [vmem:[%s868 + $0x60] sm:$0xf]
        %v886 = vld [vmem:[%s868 + $0x64] sm:$0xf]
        %v887 = vld [vmem:[%s868 + $0x6c] sm:$0xf]
        %v888 = vld [vmem:[%s868 + $0x70] sm:$0xf]
        %v889 = vld [vmem:[%s868 + $0x78] sm:$0xf]
        %v890 = vld [vmem:[%s868 + $0x7c] sm:$0xf]
        %v891 = vld [vmem:[%s868 + $0x84] sm:$0xf]
        %v892 = vld [vmem:[%s868 + $0x88] sm:$0xf]
        %v893 = vld [vmem:[%s868 + $0x90] sm:$0xf]
        %v894 = vld [vmem:[%s868 + $0x94] sm:$0xf]
        %v895 = vld [vmem:[%s868 + $0x9c] sm:$0xf]
        %v896 = vld [vmem:[%s868 + $0xa0] sm:$0xf]
        %v897 = vld [vmem:[%s868 + $0xa8] sm:$0xf]
        %v898 = vld [vmem:[%s868 + $0xac] sm:$0xf]
        %v899 = vld [vmem:[%s868 + $0xb4] sm:$0xf]
        %v900 = vld [vmem:[%s868 + $0xb8] sm:$0xf]
        %v901 = vld [vmem:[%s868 + $0x8] sm:$0x1]
        %v902 = vld [vmem:[%s868 + $0x14] sm:$0x1]
        %v903 = vld [vmem:[%s868 + $0x20] sm:$0x1]
        %v904 = vld [vmem:[%s868 + $0x2c] sm:$0x1]
        %v905 = vld [vmem:[%s868 + $0x38] sm:$0x1]
        %v906 = vld [vmem:[%s868 + $0x44] sm:$0x1]
        %v907 = vld [vmem:[%s868 + $0x50] sm:$0x1]
        %v908 = vld [vmem:[%s868 + $0x5c] sm:$0x1]
        %v909 = vld [vmem:[%s868 + $0x68] sm:$0x1]
        %v910 = vld [vmem:[%s868 + $0x74] sm:$0x1]
        %v911 = vld [vmem:[%s868 + $0x80] sm:$0x1]
        %v912 = vld [vmem:[%s868 + $0x8c] sm:$0x1]
        %v913 = vld [vmem:[%s868 + $0x98] sm:$0x1]
        %v914 = vld [vmem:[%s868 + $0xa4] sm:$0x1]
        %v915 = vld [vmem:[%s868 + $0xb0] sm:$0x1]
        %v916 = vld [vmem:[%s868 + $0xbc] sm:$0x1]
        %v918 = vshrl.u32 %v869, 16
        %v920 = vrot.slane %v918, 4
        %v921 = vshll.u32 %v869, 16
        %v923 = vrot.slane %v921, 5
        %v924 = vor.u32 %v920, %v923
        %v925 = vrot.slane %v924, 4
        %v927 = vshll.u32 %v870, 16
        %v929 = vrot.slane %v927, 5
        %v930 = vsel %vm304, %v925, %v929
        %v931 = vshrl.u32 %v870, 16
        %v933 = vrot.slane %v931, 4
        %v934 = vor.u32 %v933, %v929
        %v935 = vrot.slane %v934, 4
        %v937 = vshll.u32 %v901, 16
        %v939 = vrot.slane %v937, 5
        %v940 = vsel %vm304, %v935, %v939
        %v942 = vshrl.u32 %v871, 16
        %v944 = vrot.slane %v942, 4
        %v945 = vshll.u32 %v871, 16
        %v947 = vrot.slane %v945, 5
        %v948 = vor.u32 %v944, %v947
        %v949 = vrot.slane %v948, 4
        %v951 = vshll.u32 %v872, 16
        %v953 = vrot.slane %v951, 5
        %v954 = vsel %vm304, %v949, %v953
        %v955 = vshrl.u32 %v872, 16
        %v957 = vrot.slane %v955, 4
        %v958 = vor.u32 %v957, %v953
        %v959 = vrot.slane %v958, 4
        %v961 = vshll.u32 %v902, 16
        %v963 = vrot.slane %v961, 5
        %v964 = vsel %vm304, %v959, %v963
        %v966 = vshrl.u32 %v873, 16
        %v968 = vrot.slane %v966, 4
        %v969 = vshll.u32 %v873, 16
        %v971 = vrot.slane %v969, 5
        %v972 = vor.u32 %v968, %v971
        %v973 = vrot.slane %v972, 4
        %v975 = vshll.u32 %v874, 16
        %v977 = vrot.slane %v975, 5
        %v978 = vsel %vm304, %v973, %v977
        %v979 = vshrl.u32 %v874, 16
        %v981 = vrot.slane %v979, 4
        %v982 = vor.u32 %v981, %v977
        %v983 = vrot.slane %v982, 4
        %v985 = vshll.u32 %v903, 16
        %v987 = vrot.slane %v985, 5
        %v988 = vsel %vm304, %v983, %v987
        %v990 = vshrl.u32 %v875, 16
        %v992 = vrot.slane %v990, 4
        %v993 = vshll.u32 %v875, 16
        %v995 = vrot.slane %v993, 5
        %v996 = vor.u32 %v992, %v995
        %v997 = vrot.slane %v996, 4
        %v999 = vshll.u32 %v876, 16
        %v1001 = vrot.slane %v999, 5
        %v1002 = vsel %vm304, %v997, %v1001
        %v1003 = vshrl.u32 %v876, 16
        %v1005 = vrot.slane %v1003, 4
        %v1006 = vor.u32 %v1005, %v1001
        %v1007 = vrot.slane %v1006, 4
        %v1009 = vshll.u32 %v904, 16
        %v1011 = vrot.slane %v1009, 5
        %v1012 = vsel %vm304, %v1007, %v1011
        %v1014 = vshrl.u32 %v877, 16
        %v1016 = vrot.slane %v1014, 4
        %v1017 = vshll.u32 %v877, 16
        %v1019 = vrot.slane %v1017, 5
        %v1020 = vor.u32 %v1016, %v1019
        %v1021 = vrot.slane %v1020, 4
        %v1023 = vshll.u32 %v878, 16
        %v1025 = vrot.slane %v1023, 5
        %v1026 = vsel %vm304, %v1021, %v1025
        %v1027 = vshrl.u32 %v878, 16
        %v1029 = vrot.slane %v1027, 4
        %v1030 = vor.u32 %v1029, %v1025
        %v1031 = vrot.slane %v1030, 4
        %v1033 = vshll.u32 %v905, 16
        %v1035 = vrot.slane %v1033, 5
        %v1036 = vsel %vm304, %v1031, %v1035
        %v1038 = vshrl.u32 %v879, 16
        %v1040 = vrot.slane %v1038, 4
        %v1041 = vshll.u32 %v879, 16
        %v1043 = vrot.slane %v1041, 5
        %v1044 = vor.u32 %v1040, %v1043
        %v1045 = vrot.slane %v1044, 4
        %v1047 = vshll.u32 %v880, 16
        %v1049 = vrot.slane %v1047, 5
        %v1050 = vsel %vm304, %v1045, %v1049
        %v1051 = vshrl.u32 %v880, 16
        %v1053 = vrot.slane %v1051, 4
        %v1054 = vor.u32 %v1053, %v1049
        %v1055 = vrot.slane %v1054, 4
        %v1057 = vshll.u32 %v906, 16
        %v1059 = vrot.slane %v1057, 5
        %v1060 = vsel %vm304, %v1055, %v1059
        %v1062 = vshrl.u32 %v881, 16
        %v1064 = vrot.slane %v1062, 4
        %v1065 = vshll.u32 %v881, 16
        %v1067 = vrot.slane %v1065, 5
        %v1068 = vor.u32 %v1064, %v1067
        %v1069 = vrot.slane %v1068, 4
        %v1071 = vshll.u32 %v882, 16
        %v1073 = vrot.slane %v1071, 5
        %v1074 = vsel %vm304, %v1069, %v1073
        %v1075 = vshrl.u32 %v882, 16
        %v1077 = vrot.slane %v1075, 4
        %v1078 = vor.u32 %v1077, %v1073
        %v1079 = vrot.slane %v1078, 4
        %v1081 = vshll.u32 %v907, 16
        %v1083 = vrot.slane %v1081, 5
        %v1084 = vsel %vm304, %v1079, %v1083
        %v1086 = vshrl.u32 %v883, 16
        %v1088 = vrot.slane %v1086, 4
        %v1089 = vshll.u32 %v883, 16
        %v1091 = vrot.slane %v1089, 5
        %v1092 = vor.u32 %v1088, %v1091
        %v1093 = vrot.slane %v1092, 4
        %v1095 = vshll.u32 %v884, 16
        %v1097 = vrot.slane %v1095, 5
        %v1098 = vsel %vm304, %v1093, %v1097
        %v1099 = vshrl.u32 %v884, 16
        %v1101 = vrot.slane %v1099, 4
        %v1102 = vor.u32 %v1101, %v1097
        %v1103 = vrot.slane %v1102, 4
        %v1105 = vshll.u32 %v908, 16
        %v1107 = vrot.slane %v1105, 5
        %v1108 = vsel %vm304, %v1103, %v1107
        %v1110 = vshrl.u32 %v885, 16
        %v1112 = vrot.slane %v1110, 4
        %v1113 = vshll.u32 %v885, 16
        %v1115 = vrot.slane %v1113, 5
        %v1116 = vor.u32 %v1112, %v1115
        %v1117 = vrot.slane %v1116, 4
        %v1119 = vshll.u32 %v886, 16
        %v1121 = vrot.slane %v1119, 5
        %v1122 = vsel %vm304, %v1117, %v1121
        %v1123 = vshrl.u32 %v886, 16
        %v1125 = vrot.slane %v1123, 4
        %v1126 = vor.u32 %v1125, %v1121
        %v1127 = vrot.slane %v1126, 4
        %v1129 = vshll.u32 %v909, 16
        %v1131 = vrot.slane %v1129, 5
        %v1132 = vsel %vm304, %v1127, %v1131
        %v1134 = vshrl.u32 %v887, 16
        %v1136 = vrot.slane %v1134, 4
        %v1137 = vshll.u32 %v887, 16
        %v1139 = vrot.slane %v1137, 5
        %v1140 = vor.u32 %v1136, %v1139
        %v1141 = vrot.slane %v1140, 4
        %v1143 = vshll.u32 %v888, 16
        %v1145 = vrot.slane %v1143, 5
        %v1146 = vsel %vm304, %v1141, %v1145
        %v1147 = vshrl.u32 %v888, 16
        %v1149 = vrot.slane %v1147, 4
        %v1150 = vor.u32 %v1149, %v1145
        %v1151 = vrot.slane %v1150, 4
        %v1153 = vshll.u32 %v910, 16
        %v1155 = vrot.slane %v1153, 5
        %v1156 = vsel %vm304, %v1151, %v1155
        %v1158 = vshrl.u32 %v889, 16
        %v1160 = vrot.slane %v1158, 4
        %v1161 = vshll.u32 %v889, 16
        %v1163 = vrot.slane %v1161, 5
        %v1164 = vor.u32 %v1160, %v1163
        %v1165 = vrot.slane %v1164, 4
        %v1167 = vshll.u32 %v890, 16
        %v1169 = vrot.slane %v1167, 5
        %v1170 = vsel %vm304, %v1165, %v1169
        %v1171 = vshrl.u32 %v890, 16
        %v1173 = vrot.slane %v1171, 4
        %v1174 = vor.u32 %v1173, %v1169
        %v1175 = vrot.slane %v1174, 4
        %v1177 = vshll.u32 %v911, 16
        %v1179 = vrot.slane %v1177, 5
        %v1180 = vsel %vm304, %v1175, %v1179
        %v1182 = vshrl.u32 %v891, 16
        %v1184 = vrot.slane %v1182, 4
        %v1185 = vshll.u32 %v891, 16
        %v1187 = vrot.slane %v1185, 5
        %v1188 = vor.u32 %v1184, %v1187
        %v1189 = vrot.slane %v1188, 4
        %v1191 = vshll.u32 %v892, 16
        %v1193 = vrot.slane %v1191, 5
        %v1194 = vsel %vm304, %v1189, %v1193
        %v1195 = vshrl.u32 %v892, 16
        %v1197 = vrot.slane %v1195, 4
        %v1198 = vor.u32 %v1197, %v1193
        %v1199 = vrot.slane %v1198, 4
        %v1201 = vshll.u32 %v912, 16
        %v1203 = vrot.slane %v1201, 5
        %v1204 = vsel %vm304, %v1199, %v1203
        %v1206 = vshrl.u32 %v893, 16
        %v1208 = vrot.slane %v1206, 4
        %v1209 = vshll.u32 %v893, 16
        %v1211 = vrot.slane %v1209, 5
        %v1212 = vor.u32 %v1208, %v1211
        %v1213 = vrot.slane %v1212, 4
        %v1215 = vshll.u32 %v894, 16
        %v1217 = vrot.slane %v1215, 5
        %v1218 = vsel %vm304, %v1213, %v1217
        %v1219 = vshrl.u32 %v894, 16
        %v1221 = vrot.slane %v1219, 4
        %v1222 = vor.u32 %v1221, %v1217
        %v1223 = vrot.slane %v1222, 4
        %v1225 = vshll.u32 %v913, 16
        %v1227 = vrot.slane %v1225, 5
        %v1228 = vsel %vm304, %v1223, %v1227
        %v1230 = vshrl.u32 %v895, 16
        %v1232 = vrot.slane %v1230, 4
        %v1233 = vshll.u32 %v895, 16
        %v1235 = vrot.slane %v1233, 5
        %v1236 = vor.u32 %v1232, %v1235
        %v1237 = vrot.slane %v1236, 4
        %v1239 = vshll.u32 %v896, 16
        %v1241 = vrot.slane %v1239, 5
        %v1242 = vsel %vm304, %v1237, %v1241
        %v1243 = vshrl.u32 %v896, 16
        %v1245 = vrot.slane %v1243, 4
        %v1246 = vor.u32 %v1245, %v1241
        %v1247 = vrot.slane %v1246, 4
        %v1249 = vshll.u32 %v914, 16
        %v1251 = vrot.slane %v1249, 5
        %v1252 = vsel %vm304, %v1247, %v1251
        %v1254 = vshrl.u32 %v897, 16
        %v1256 = vrot.slane %v1254, 4
        %v1257 = vshll.u32 %v897, 16
        %v1259 = vrot.slane %v1257, 5
        %v1260 = vor.u32 %v1256, %v1259
        %v1261 = vrot.slane %v1260, 4
        %v1263 = vshll.u32 %v898, 16
        %v1265 = vrot.slane %v1263, 5
        %v1266 = vsel %vm304, %v1261, %v1265
        %v1267 = vshrl.u32 %v898, 16
        %v1269 = vrot.slane %v1267, 4
        %v1270 = vor.u32 %v1269, %v1265
        %v1271 = vrot.slane %v1270, 4
        %v1273 = vshll.u32 %v915, 16
        %v1275 = vrot.slane %v1273, 5
        %v1276 = vsel %vm304, %v1271, %v1275
        %v1278 = vshrl.u32 %v899, 16
        %v1280 = vrot.slane %v1278, 4
        %v1281 = vshll.u32 %v899, 16
        %v1283 = vrot.slane %v1281, 5
        %v1284 = vor.u32 %v1280, %v1283
        %v1285 = vrot.slane %v1284, 4
        %v1287 = vshll.u32 %v900, 16
        %v1289 = vrot.slane %v1287, 5
        %v1290 = vsel %vm304, %v1285, %v1289
        %v1291 = vshrl.u32 %v900, 16
        %v1293 = vrot.slane %v1291, 4
        %v1294 = vor.u32 %v1293, %v1289
        %v1295 = vrot.slane %v1294, 4
        %v1297 = vshll.u32 %v916, 16
        %v1299 = vrot.slane %v1297, 5
        %v1300 = vsel %vm304, %v1295, %v1299
        %v1301 = vld [vmem:[%s868] sm:$0xe]
        %v1302 = vld [vmem:[%s868 + $0xc] sm:$0xe]
        %v1303 = vld [vmem:[%s868 + $0x18] sm:$0xe]
        %v1304 = vld [vmem:[%s868 + $0x24] sm:$0xe]
        %v1305 = vld [vmem:[%s868 + $0x30] sm:$0xe]
        %v1306 = vld [vmem:[%s868 + $0x3c] sm:$0xe]
        %v1307 = vld [vmem:[%s868 + $0x48] sm:$0xe]
        %v1308 = vld [vmem:[%s868 + $0x54] sm:$0xe]
        %v1309 = vld [vmem:[%s868 + $0x60] sm:$0xe]
        %v1310 = vld [vmem:[%s868 + $0x6c] sm:$0xe]
        %v1311 = vld [vmem:[%s868 + $0x78] sm:$0xe]
        %v1312 = vld [vmem:[%s868 + $0x84] sm:$0xe]
        %v1313 = vld [vmem:[%s868 + $0x90] sm:$0xe]
        %v1314 = vld [vmem:[%s868 + $0x9c] sm:$0xe]
        %v1315 = vld [vmem:[%s868 + $0xa8] sm:$0xe]
        %v1316 = vld [vmem:[%s868 + $0xb4] sm:$0xe]
        %v1365 = vrot.slane %v1301, 5
        %v1366 = vrot.slane %v1365, 4
        %v1367 = vrot.slane %v870, 5
        %v1368 = vsel %vm755, %v1366, %v1367
        %v1369 = vrot.slane %v1367, 4
        %v1370 = vrot.slane %v901, 5
        %v1371 = vsel %vm755, %v1369, %v1370
        %v1372 = vrot.slane %v1302, 5
        %v1373 = vrot.slane %v1372, 4
        %v1374 = vrot.slane %v872, 5
        %v1375 = vsel %vm755, %v1373, %v1374
        %v1376 = vrot.slane %v1374, 4
        %v1377 = vrot.slane %v902, 5
        %v1378 = vsel %vm755, %v1376, %v1377
        %v1379 = vrot.slane %v1303, 5
        %v1380 = vrot.slane %v1379, 4
        %v1381 = vrot.slane %v874, 5
        %v1382 = vsel %vm755, %v1380, %v1381
        %v1383 = vrot.slane %v1381, 4
        %v1384 = vrot.slane %v903, 5
        %v1385 = vsel %vm755, %v1383, %v1384
        %v1386 = vrot.slane %v1304, 5
        %v1387 = vrot.slane %v1386, 4
        %v1388 = vrot.slane %v876, 5
        %v1389 = vsel %vm755, %v1387, %v1388
        %v1390 = vrot.slane %v1388, 4
        %v1391 = vrot.slane %v904, 5
        %v1392 = vsel %vm755, %v1390, %v1391
        %v1393 = vrot.slane %v1305, 5
        %v1394 = vrot.slane %v1393, 4
        %v1395 = vrot.slane %v878, 5
        %v1396 = vsel %vm755, %v1394, %v1395
        %v1397 = vrot.slane %v1395, 4
        %v1398 = vrot.slane %v905, 5
        %v1399 = vsel %vm755, %v1397, %v1398
        %v1400 = vrot.slane %v1306, 5
        %v1401 = vrot.slane %v1400, 4
        %v1402 = vrot.slane %v880, 5
        %v1403 = vsel %vm755, %v1401, %v1402
        %v1404 = vrot.slane %v1402, 4
        %v1405 = vrot.slane %v906, 5
        %v1406 = vsel %vm755, %v1404, %v1405
        %v1407 = vrot.slane %v1307, 5
        %v1408 = vrot.slane %v1407, 4
        %v1409 = vrot.slane %v882, 5
        %v1410 = vsel %vm755, %v1408, %v1409
        %v1411 = vrot.slane %v1409, 4
        %v1412 = vrot.slane %v907, 5
        %v1413 = vsel %vm755, %v1411, %v1412
        %v1414 = vrot.slane %v1308, 5
        %v1415 = vrot.slane %v1414, 4
        %v1416 = vrot.slane %v884, 5
        %v1417 = vsel %vm755, %v1415, %v1416
        %v1418 = vrot.slane %v1416, 4
        %v1419 = vrot.slane %v908, 5
        %v1420 = vsel %vm755, %v1418, %v1419
        %v1421 = vrot.slane %v1309, 5
        %v1422 = vrot.slane %v1421, 4
        %v1423 = vrot.slane %v886, 5
        %v1424 = vsel %vm755, %v1422, %v1423
        %v1425 = vrot.slane %v1423, 4
        %v1426 = vrot.slane %v909, 5
        %v1427 = vsel %vm755, %v1425, %v1426
        %v1428 = vrot.slane %v1310, 5
        %v1429 = vrot.slane %v1428, 4
        %v1430 = vrot.slane %v888, 5
        %v1431 = vsel %vm755, %v1429, %v1430
        %v1432 = vrot.slane %v1430, 4
        %v1433 = vrot.slane %v910, 5
        %v1434 = vsel %vm755, %v1432, %v1433
        %v1435 = vrot.slane %v1311, 5
        %v1436 = vrot.slane %v1435, 4
        %v1437 = vrot.slane %v890, 5
        %v1438 = vsel %vm755, %v1436, %v1437
        %v1439 = vrot.slane %v1437, 4
        %v1440 = vrot.slane %v911, 5
        %v1441 = vsel %vm755, %v1439, %v1440
        %v1442 = vrot.slane %v1312, 5
        %v1443 = vrot.slane %v1442, 4
        %v1444 = vrot.slane %v892, 5
        %v1445 = vsel %vm755, %v1443, %v1444
        %v1446 = vrot.slane %v1444, 4
        %v1447 = vrot.slane %v912, 5
        %v1448 = vsel %vm755, %v1446, %v1447
        %v1449 = vrot.slane %v1313, 5
        %v1450 = vrot.slane %v1449, 4
        %v1451 = vrot.slane %v894, 5
        %v1452 = vsel %vm755, %v1450, %v1451
        %v1453 = vrot.slane %v1451, 4
        %v1454 = vrot.slane %v913, 5
        %v1455 = vsel %vm755, %v1453, %v1454
        %v1456 = vrot.slane %v1314, 5
        %v1457 = vrot.slane %v1456, 4
        %v1458 = vrot.slane %v896, 5
        %v1459 = vsel %vm755, %v1457, %v1458
        %v1460 = vrot.slane %v1458, 4
        %v1461 = vrot.slane %v914, 5
        %v1462 = vsel %vm755, %v1460, %v1461
        %v1463 = vrot.slane %v1315, 5
        %v1464 = vrot.slane %v1463, 4
        %v1465 = vrot.slane %v898, 5
        %v1466 = vsel %vm755, %v1464, %v1465
        %v1467 = vrot.slane %v1465, 4
        %v1468 = vrot.slane %v915, 5
        %v1469 = vsel %vm755, %v1467, %v1468
        %v1470 = vrot.slane %v1316, 5
        %v1471 = vrot.slane %v1470, 4
        %v1472 = vrot.slane %v900, 5
        %v1473 = vsel %vm755, %v1471, %v1472
        %v1474 = vrot.slane %v1472, 4
        %v1475 = vrot.slane %v916, 5
        %v1476 = vsel %vm755, %v1474, %v1475
        %s1477 = scalar_lea.vmem %s226, 24
        %v1478 = vld [vmem:[%s1477] sm:$0xf]
        %v1479 = vld [vmem:[%s1477 + $0x4] sm:$0xf]
        %v1480 = vld [vmem:[%s1477 + $0xc] sm:$0xf]
        %v1481 = vld [vmem:[%s1477 + $0x10] sm:$0xf]
        %v1482 = vld [vmem:[%s1477 + $0x18] sm:$0xf]
        %v1483 = vld [vmem:[%s1477 + $0x1c] sm:$0xf]
        %v1484 = vld [vmem:[%s1477 + $0x24] sm:$0xf]
        %v1485 = vld [vmem:[%s1477 + $0x28] sm:$0xf]
        %v1486 = vld [vmem:[%s1477 + $0x30] sm:$0xf]
        %v1487 = vld [vmem:[%s1477 + $0x34] sm:$0xf]
        %v1488 = vld [vmem:[%s1477 + $0x3c] sm:$0xf]
        %v1489 = vld [vmem:[%s1477 + $0x40] sm:$0xf]
        %v1490 = vld [vmem:[%s1477 + $0x48] sm:$0xf]
        %v1491 = vld [vmem:[%s1477 + $0x4c] sm:$0xf]
        %v1492 = vld [vmem:[%s1477 + $0x54] sm:$0xf]
        %v1493 = vld [vmem:[%s1477 + $0x58] sm:$0xf]
        %v1494 = vld [vmem:[%s1477 + $0x60] sm:$0xf]
        %v1495 = vld [vmem:[%s1477 + $0x64] sm:$0xf]
        %v1496 = vld [vmem:[%s1477 + $0x6c] sm:$0xf]
        %v1497 = vld [vmem:[%s1477 + $0x70] sm:$0xf]
        %v1498 = vld [vmem:[%s1477 + $0x78] sm:$0xf]
        %v1499 = vld [vmem:[%s1477 + $0x7c] sm:$0xf]
        %v1500 = vld [vmem:[%s1477 + $0x84] sm:$0xf]
        %v1501 = vld [vmem:[%s1477 + $0x88] sm:$0xf]
        %v1502 = vld [vmem:[%s1477 + $0x90] sm:$0xf]
        %v1503 = vld [vmem:[%s1477 + $0x94] sm:$0xf]
        %v1504 = vld [vmem:[%s1477 + $0x9c] sm:$0xf]
        %v1505 = vld [vmem:[%s1477 + $0xa0] sm:$0xf]
        %v1506 = vld [vmem:[%s1477 + $0xa8] sm:$0xf]
        %v1507 = vld [vmem:[%s1477 + $0xac] sm:$0xf]
        %v1508 = vld [vmem:[%s1477 + $0xb4] sm:$0xf]
        %v1509 = vld [vmem:[%s1477 + $0xb8] sm:$0xf]
        %v1510 = vld [vmem:[%s1477 + $0x8] sm:$0x1]
        %v1511 = vld [vmem:[%s1477 + $0x14] sm:$0x1]
        %v1512 = vld [vmem:[%s1477 + $0x20] sm:$0x1]
        %v1513 = vld [vmem:[%s1477 + $0x2c] sm:$0x1]
        %v1514 = vld [vmem:[%s1477 + $0x38] sm:$0x1]
        %v1515 = vld [vmem:[%s1477 + $0x44] sm:$0x1]
        %v1516 = vld [vmem:[%s1477 + $0x50] sm:$0x1]
        %v1517 = vld [vmem:[%s1477 + $0x5c] sm:$0x1]
        %v1518 = vld [vmem:[%s1477 + $0x68] sm:$0x1]
        %v1519 = vld [vmem:[%s1477 + $0x74] sm:$0x1]
        %v1520 = vld [vmem:[%s1477 + $0x80] sm:$0x1]
        %v1521 = vld [vmem:[%s1477 + $0x8c] sm:$0x1]
        %v1522 = vld [vmem:[%s1477 + $0x98] sm:$0x1]
        %v1523 = vld [vmem:[%s1477 + $0xa4] sm:$0x1]
        %v1524 = vld [vmem:[%s1477 + $0xb0] sm:$0x1]
        %v1525 = vld [vmem:[%s1477 + $0xbc] sm:$0x1]
        %v1527 = vshrl.u32 %v1478, 16
        %v1529 = vrot.slane %v1527, 4
        %v1530 = vshll.u32 %v1478, 16
        %v1532 = vrot.slane %v1530, 5
        %v1533 = vor.u32 %v1529, %v1532
        %v1534 = vrot.slane %v1533, 4
        %v1536 = vshll.u32 %v1479, 16
        %v1538 = vrot.slane %v1536, 5
        %v1539 = vsel %vm304, %v1534, %v1538
        %v1540 = vshrl.u32 %v1479, 16
        %v1542 = vrot.slane %v1540, 4
        %v1543 = vor.u32 %v1542, %v1538
        %v1544 = vrot.slane %v1543, 4
        %v1546 = vshll.u32 %v1510, 16
        %v1548 = vrot.slane %v1546, 5
        %v1549 = vsel %vm304, %v1544, %v1548
        %v1551 = vshrl.u32 %v1480, 16
        %v1553 = vrot.slane %v1551, 4
        %v1554 = vshll.u32 %v1480, 16
        %v1556 = vrot.slane %v1554, 5
        %v1557 = vor.u32 %v1553, %v1556
        %v1558 = vrot.slane %v1557, 4
        %v1560 = vshll.u32 %v1481, 16
        %v1562 = vrot.slane %v1560, 5
        %v1563 = vsel %vm304, %v1558, %v1562
        %v1564 = vshrl.u32 %v1481, 16
        %v1566 = vrot.slane %v1564, 4
        %v1567 = vor.u32 %v1566, %v1562
        %v1568 = vrot.slane %v1567, 4
        %v1570 = vshll.u32 %v1511, 16
        %v1572 = vrot.slane %v1570, 5
        %v1573 = vsel %vm304, %v1568, %v1572
        %v1575 = vshrl.u32 %v1482, 16
        %v1577 = vrot.slane %v1575, 4
        %v1578 = vshll.u32 %v1482, 16
        %v1580 = vrot.slane %v1578, 5
        %v1581 = vor.u32 %v1577, %v1580
        %v1582 = vrot.slane %v1581, 4
        %v1584 = vshll.u32 %v1483, 16
        %v1586 = vrot.slane %v1584, 5
        %v1587 = vsel %vm304, %v1582, %v1586
        %v1588 = vshrl.u32 %v1483, 16
        %v1590 = vrot.slane %v1588, 4
        %v1591 = vor.u32 %v1590, %v1586
        %v1592 = vrot.slane %v1591, 4
        %v1594 = vshll.u32 %v1512, 16
        %v1596 = vrot.slane %v1594, 5
        %v1597 = vsel %vm304, %v1592, %v1596
        %v1599 = vshrl.u32 %v1484, 16
        %v1601 = vrot.slane %v1599, 4
        %v1602 = vshll.u32 %v1484, 16
        %v1604 = vrot.slane %v1602, 5
        %v1605 = vor.u32 %v1601, %v1604
        %v1606 = vrot.slane %v1605, 4
        %v1608 = vshll.u32 %v1485, 16
        %v1610 = vrot.slane %v1608, 5
        %v1611 = vsel %vm304, %v1606, %v1610
        %v1612 = vshrl.u32 %v1485, 16
        %v1614 = vrot.slane %v1612, 4
        %v1615 = vor.u32 %v1614, %v1610
        %v1616 = vrot.slane %v1615, 4
        %v1618 = vshll.u32 %v1513, 16
        %v1620 = vrot.slane %v1618, 5
        %v1621 = vsel %vm304, %v1616, %v1620
        %v1623 = vshrl.u32 %v1486, 16
        %v1625 = vrot.slane %v1623, 4
        %v1626 = vshll.u32 %v1486, 16
        %v1628 = vrot.slane %v1626, 5
        %v1629 = vor.u32 %v1625, %v1628
        %v1630 = vrot.slane %v1629, 4
        %v1632 = vshll.u32 %v1487, 16
        %v1634 = vrot.slane %v1632, 5
        %v1635 = vsel %vm304, %v1630, %v1634
        %v1636 = vshrl.u32 %v1487, 16
        %v1638 = vrot.slane %v1636, 4
        %v1639 = vor.u32 %v1638, %v1634
        %v1640 = vrot.slane %v1639, 4
        %v1642 = vshll.u32 %v1514, 16
        %v1644 = vrot.slane %v1642, 5
        %v1645 = vsel %vm304, %v1640, %v1644
        %v1647 = vshrl.u32 %v1488, 16
        %v1649 = vrot.slane %v1647, 4
        %v1650 = vshll.u32 %v1488, 16
        %v1652 = vrot.slane %v1650, 5
        %v1653 = vor.u32 %v1649, %v1652
        %v1654 = vrot.slane %v1653, 4
        %v1656 = vshll.u32 %v1489, 16
        %v1658 = vrot.slane %v1656, 5
        %v1659 = vsel %vm304, %v1654, %v1658
        %v1660 = vshrl.u32 %v1489, 16
        %v1662 = vrot.slane %v1660, 4
        %v1663 = vor.u32 %v1662, %v1658
        %v1664 = vrot.slane %v1663, 4
        %v1666 = vshll.u32 %v1515, 16
        %v1668 = vrot.slane %v1666, 5
        %v1669 = vsel %vm304, %v1664, %v1668
        %v1671 = vshrl.u32 %v1490, 16
        %v1673 = vrot.slane %v1671, 4
        %v1674 = vshll.u32 %v1490, 16
        %v1676 = vrot.slane %v1674, 5
        %v1677 = vor.u32 %v1673, %v1676
        %v1678 = vrot.slane %v1677, 4
        %v1680 = vshll.u32 %v1491, 16
        %v1682 = vrot.slane %v1680, 5
        %v1683 = vsel %vm304, %v1678, %v1682
        %v1684 = vshrl.u32 %v1491, 16
        %v1686 = vrot.slane %v1684, 4
        %v1687 = vor.u32 %v1686, %v1682
        %v1688 = vrot.slane %v1687, 4
        %v1690 = vshll.u32 %v1516, 16
        %v1692 = vrot.slane %v1690, 5
        %v1693 = vsel %vm304, %v1688, %v1692
        %v1695 = vshrl.u32 %v1492, 16
        %v1697 = vrot.slane %v1695, 4
        %v1698 = vshll.u32 %v1492, 16
        %v1700 = vrot.slane %v1698, 5
        %v1701 = vor.u32 %v1697, %v1700
        %v1702 = vrot.slane %v1701, 4
        %v1704 = vshll.u32 %v1493, 16
        %v1706 = vrot.slane %v1704, 5
        %v1707 = vsel %vm304, %v1702, %v1706
        %v1708 = vshrl.u32 %v1493, 16
        %v1710 = vrot.slane %v1708, 4
        %v1711 = vor.u32 %v1710, %v1706
        %v1712 = vrot.slane %v1711, 4
        %v1714 = vshll.u32 %v1517, 16
        %v1716 = vrot.slane %v1714, 5
        %v1717 = vsel %vm304, %v1712, %v1716
        %v1719 = vshrl.u32 %v1494, 16
        %v1721 = vrot.slane %v1719, 4
        %v1722 = vshll.u32 %v1494, 16
        %v1724 = vrot.slane %v1722, 5
        %v1725 = vor.u32 %v1721, %v1724
        %v1726 = vrot.slane %v1725, 4
        %v1728 = vshll.u32 %v1495, 16
        %v1730 = vrot.slane %v1728, 5
        %v1731 = vsel %vm304, %v1726, %v1730
        %v1732 = vshrl.u32 %v1495, 16
        %v1734 = vrot.slane %v1732, 4
        %v1735 = vor.u32 %v1734, %v1730
        %v1736 = vrot.slane %v1735, 4
        %v1738 = vshll.u32 %v1518, 16
        %v1740 = vrot.slane %v1738, 5
        %v1741 = vsel %vm304, %v1736, %v1740
        %v1743 = vshrl.u32 %v1496, 16
        %v1745 = vrot.slane %v1743, 4
        %v1746 = vshll.u32 %v1496, 16
        %v1748 = vrot.slane %v1746, 5
        %v1749 = vor.u32 %v1745, %v1748
        %v1750 = vrot.slane %v1749, 4
        %v1752 = vshll.u32 %v1497, 16
        %v1754 = vrot.slane %v1752, 5
        %v1755 = vsel %vm304, %v1750, %v1754
        %v1756 = vshrl.u32 %v1497, 16
        %v1758 = vrot.slane %v1756, 4
        %v1759 = vor.u32 %v1758, %v1754
        %v1760 = vrot.slane %v1759, 4
        %v1762 = vshll.u32 %v1519, 16
        %v1764 = vrot.slane %v1762, 5
        %v1765 = vsel %vm304, %v1760, %v1764
        %v1767 = vshrl.u32 %v1498, 16
        %v1769 = vrot.slane %v1767, 4
        %v1770 = vshll.u32 %v1498, 16
        %v1772 = vrot.slane %v1770, 5
        %v1773 = vor.u32 %v1769, %v1772
        %v1774 = vrot.slane %v1773, 4
        %v1776 = vshll.u32 %v1499, 16
        %v1778 = vrot.slane %v1776, 5
        %v1779 = vsel %vm304, %v1774, %v1778
        %v1780 = vshrl.u32 %v1499, 16
        %v1782 = vrot.slane %v1780, 4
        %v1783 = vor.u32 %v1782, %v1778
        %v1784 = vrot.slane %v1783, 4
        %v1786 = vshll.u32 %v1520, 16
        %v1788 = vrot.slane %v1786, 5
        %v1789 = vsel %vm304, %v1784, %v1788
        %v1791 = vshrl.u32 %v1500, 16
        %v1793 = vrot.slane %v1791, 4
        %v1794 = vshll.u32 %v1500, 16
        %v1796 = vrot.slane %v1794, 5
        %v1797 = vor.u32 %v1793, %v1796
        %v1798 = vrot.slane %v1797, 4
        %v1800 = vshll.u32 %v1501, 16
        %v1802 = vrot.slane %v1800, 5
        %v1803 = vsel %vm304, %v1798, %v1802
        %v1804 = vshrl.u32 %v1501, 16
        %v1806 = vrot.slane %v1804, 4
        %v1807 = vor.u32 %v1806, %v1802
        %v1808 = vrot.slane %v1807, 4
        %v1810 = vshll.u32 %v1521, 16
        %v1812 = vrot.slane %v1810, 5
        %v1813 = vsel %vm304, %v1808, %v1812
        %v1815 = vshrl.u32 %v1502, 16
        %v1817 = vrot.slane %v1815, 4
        %v1818 = vshll.u32 %v1502, 16
        %v1820 = vrot.slane %v1818, 5
        %v1821 = vor.u32 %v1817, %v1820
        %v1822 = vrot.slane %v1821, 4
        %v1824 = vshll.u32 %v1503, 16
        %v1826 = vrot.slane %v1824, 5
        %v1827 = vsel %vm304, %v1822, %v1826
        %v1828 = vshrl.u32 %v1503, 16
        %v1830 = vrot.slane %v1828, 4
        %v1831 = vor.u32 %v1830, %v1826
        %v1832 = vrot.slane %v1831, 4
        %v1834 = vshll.u32 %v1522, 16
        %v1836 = vrot.slane %v1834, 5
        %v1837 = vsel %vm304, %v1832, %v1836
        %v1839 = vshrl.u32 %v1504, 16
        %v1841 = vrot.slane %v1839, 4
        %v1842 = vshll.u32 %v1504, 16
        %v1844 = vrot.slane %v1842, 5
        %v1845 = vor.u32 %v1841, %v1844
        %v1846 = vrot.slane %v1845, 4
        %v1848 = vshll.u32 %v1505, 16
        %v1850 = vrot.slane %v1848, 5
        %v1851 = vsel %vm304, %v1846, %v1850
        %v1852 = vshrl.u32 %v1505, 16
        %v1854 = vrot.slane %v1852, 4
        %v1855 = vor.u32 %v1854, %v1850
        %v1856 = vrot.slane %v1855, 4
        %v1858 = vshll.u32 %v1523, 16
        %v1860 = vrot.slane %v1858, 5
        %v1861 = vsel %vm304, %v1856, %v1860
        %v1863 = vshrl.u32 %v1506, 16
        %v1865 = vrot.slane %v1863, 4
        %v1866 = vshll.u32 %v1506, 16
        %v1868 = vrot.slane %v1866, 5
        %v1869 = vor.u32 %v1865, %v1868
        %v1870 = vrot.slane %v1869, 4
        %v1872 = vshll.u32 %v1507, 16
        %v1874 = vrot.slane %v1872, 5
        %v1875 = vsel %vm304, %v1870, %v1874
        %v1876 = vshrl.u32 %v1507, 16
        %v1878 = vrot.slane %v1876, 4
        %v1879 = vor.u32 %v1878, %v1874
        %v1880 = vrot.slane %v1879, 4
        %v1882 = vshll.u32 %v1524, 16
        %v1884 = vrot.slane %v1882, 5
        %v1885 = vsel %vm304, %v1880, %v1884
        %v1887 = vshrl.u32 %v1508, 16
        %v1889 = vrot.slane %v1887, 4
        %v1890 = vshll.u32 %v1508, 16
        %v1892 = vrot.slane %v1890, 5
        %v1893 = vor.u32 %v1889, %v1892
        %v1894 = vrot.slane %v1893, 4
        %v1896 = vshll.u32 %v1509, 16
        %v1898 = vrot.slane %v1896, 5
        %v1899 = vsel %vm304, %v1894, %v1898
        %v1900 = vshrl.u32 %v1509, 16
        %v1902 = vrot.slane %v1900, 4
        %v1903 = vor.u32 %v1902, %v1898
        %v1904 = vrot.slane %v1903, 4
        %v1906 = vshll.u32 %v1525, 16
        %v1908 = vrot.slane %v1906, 5
        %v1909 = vsel %vm304, %v1904, %v1908
        %v1910 = vld [vmem:[%s1477] sm:$0xe]
        %v1911 = vld [vmem:[%s1477 + $0xc] sm:$0xe]
        %v1912 = vld [vmem:[%s1477 + $0x18] sm:$0xe]
        %v1913 = vld [vmem:[%s1477 + $0x24] sm:$0xe]
        %v1914 = vld [vmem:[%s1477 + $0x30] sm:$0xe]
        %v1915 = vld [vmem:[%s1477 + $0x3c] sm:$0xe]
        %v1916 = vld [vmem:[%s1477 + $0x48] sm:$0xe]
        %v1917 = vld [vmem:[%s1477 + $0x54] sm:$0xe]
        %v1918 = vld [vmem:[%s1477 + $0x60] sm:$0xe]
        %v1919 = vld [vmem:[%s1477 + $0x6c] sm:$0xe]
        %v1920 = vld [vmem:[%s1477 + $0x78] sm:$0xe]
        %v1921 = vld [vmem:[%s1477 + $0x84] sm:$0xe]
        %v1922 = vld [vmem:[%s1477 + $0x90] sm:$0xe]
        %v1923 = vld [vmem:[%s1477 + $0x9c] sm:$0xe]
        %v1924 = vld [vmem:[%s1477 + $0xa8] sm:$0xe]
        %v1925 = vld [vmem:[%s1477 + $0xb4] sm:$0xe]
        %v1974 = vrot.slane %v1910, 5
        %v1975 = vrot.slane %v1974, 4
        %v1976 = vrot.slane %v1479, 5
        %v1977 = vsel %vm755, %v1975, %v1976
        %v1978 = vrot.slane %v1976, 4
        %v1979 = vrot.slane %v1510, 5
        %v1980 = vsel %vm755, %v1978, %v1979
        %v1981 = vrot.slane %v1911, 5
        %v1982 = vrot.slane %v1981, 4
        %v1983 = vrot.slane %v1481, 5
        %v1984 = vsel %vm755, %v1982, %v1983
        %v1985 = vrot.slane %v1983, 4
        %v1986 = vrot.slane %v1511, 5
        %v1987 = vsel %vm755, %v1985, %v1986
        %v1988 = vrot.slane %v1912, 5
        %v1989 = vrot.slane %v1988, 4
        %v1990 = vrot.slane %v1483, 5
        %v1991 = vsel %vm755, %v1989, %v1990
        %v1992 = vrot.slane %v1990, 4
        %v1993 = vrot.slane %v1512, 5
        %v1994 = vsel %vm755, %v1992, %v1993
        %v1995 = vrot.slane %v1913, 5
        %v1996 = vrot.slane %v1995, 4
        %v1997 = vrot.slane %v1485, 5
        %v1998 = vsel %vm755, %v1996, %v1997
        %v1999 = vrot.slane %v1997, 4
        %v2000 = vrot.slane %v1513, 5
        %v2001 = vsel %vm755, %v1999, %v2000
        %v2002 = vrot.slane %v1914, 5
        %v2003 = vrot.slane %v2002, 4
        %v2004 = vrot.slane %v1487, 5
        %v2005 = vsel %vm755, %v2003, %v2004
        %v2006 = vrot.slane %v2004, 4
        %v2007 = vrot.slane %v1514, 5
        %v2008 = vsel %vm755, %v2006, %v2007
        %v2009 = vrot.slane %v1915, 5
        %v2010 = vrot.slane %v2009, 4
        %v2011 = vrot.slane %v1489, 5
        %v2012 = vsel %vm755, %v2010, %v2011
        %v2013 = vrot.slane %v2011, 4
        %v2014 = vrot.slane %v1515, 5
        %v2015 = vsel %vm755, %v2013, %v2014
        %v2016 = vrot.slane %v1916, 5
        %v2017 = vrot.slane %v2016, 4
        %v2018 = vrot.slane %v1491, 5
        %v2019 = vsel %vm755, %v2017, %v2018
        %v2020 = vrot.slane %v2018, 4
        %v2021 = vrot.slane %v1516, 5
        %v2022 = vsel %vm755, %v2020, %v2021
        %v2023 = vrot.slane %v1917, 5
        %v2024 = vrot.slane %v2023, 4
        %v2025 = vrot.slane %v1493, 5
        %v2026 = vsel %vm755, %v2024, %v2025
        %v2027 = vrot.slane %v2025, 4
        %v2028 = vrot.slane %v1517, 5
        %v2029 = vsel %vm755, %v2027, %v2028
        %v2030 = vrot.slane %v1918, 5
        %v2031 = vrot.slane %v2030, 4
        %v2032 = vrot.slane %v1495, 5
        %v2033 = vsel %vm755, %v2031, %v2032
        %v2034 = vrot.slane %v2032, 4
        %v2035 = vrot.slane %v1518, 5
        %v2036 = vsel %vm755, %v2034, %v2035
        %v2037 = vrot.slane %v1919, 5
        %v2038 = vrot.slane %v2037, 4
        %v2039 = vrot.slane %v1497, 5
        %v2040 = vsel %vm755, %v2038, %v2039
        %v2041 = vrot.slane %v2039, 4
        %v2042 = vrot.slane %v1519, 5
        %v2043 = vsel %vm755, %v2041, %v2042
        %v2044 = vrot.slane %v1920, 5
        %v2045 = vrot.slane %v2044, 4
        %v2046 = vrot.slane %v1499, 5
        %v2047 = vsel %vm755, %v2045, %v2046
        %v2048 = vrot.slane %v2046, 4
        %v2049 = vrot.slane %v1520, 5
        %v2050 = vsel %vm755, %v2048, %v2049
        %v2051 = vrot.slane %v1921, 5
        %v2052 = vrot.slane %v2051, 4
        %v2053 = vrot.slane %v1501, 5
        %v2054 = vsel %vm755, %v2052, %v2053
        %v2055 = vrot.slane %v2053, 4
        %v2056 = vrot.slane %v1521, 5
        %v2057 = vsel %vm755, %v2055, %v2056
        %v2058 = vrot.slane %v1922, 5
        %v2059 = vrot.slane %v2058, 4
        %v2060 = vrot.slane %v1503, 5
        %v2061 = vsel %vm755, %v2059, %v2060
        %v2062 = vrot.slane %v2060, 4
        %v2063 = vrot.slane %v1522, 5
        %v2064 = vsel %vm755, %v2062, %v2063
        %v2065 = vrot.slane %v1923, 5
        %v2066 = vrot.slane %v2065, 4
        %v2067 = vrot.slane %v1505, 5
        %v2068 = vsel %vm755, %v2066, %v2067
        %v2069 = vrot.slane %v2067, 4
        %v2070 = vrot.slane %v1523, 5
        %v2071 = vsel %vm755, %v2069, %v2070
        %v2072 = vrot.slane %v1924, 5
        %v2073 = vrot.slane %v2072, 4
        %v2074 = vrot.slane %v1507, 5
        %v2075 = vsel %vm755, %v2073, %v2074
        %v2076 = vrot.slane %v2074, 4
        %v2077 = vrot.slane %v1524, 5
        %v2078 = vsel %vm755, %v2076, %v2077
        %v2079 = vrot.slane %v1925, 5
        %v2080 = vrot.slane %v2079, 4
        %v2081 = vrot.slane %v1509, 5
        %v2082 = vsel %vm755, %v2080, %v2081
        %v2083 = vrot.slane %v2081, 4
        %v2084 = vrot.slane %v1525, 5
        %v2085 = vsel %vm755, %v2083, %v2084
        %v2102 = vunpack.c.l.b16 %v254
        %v2103 = vunpack.c.l.b16 %v255
        %v2104 = vunpack.c.l.b16 %v256
        %v2105 = vunpack.c.l.b16 %v257
        %v2106 = vunpack.c.l.b16 %v258
        %v2107 = vunpack.c.l.b16 %v259
        %v2108 = vunpack.c.l.b16 %v260
        %v2109 = vunpack.c.l.b16 %v261
        %v2110 = vunpack.c.l.b16 %v262
        %v2111 = vunpack.c.l.b16 %v263
        %v2112 = vunpack.c.l.b16 %v264
        %v2113 = vunpack.c.l.b16 %v265
        %v2114 = vunpack.c.l.b16 %v266
        %v2115 = vunpack.c.l.b16 %v267
        %v2116 = vunpack.c.l.b16 %v268
        %v2117 = vunpack.c.l.b16 %v269
        %v2118 = vunpack.c.l.b16 %v270
        %v2119 = vunpack.c.l.b16 %v271
        %v2120 = vunpack.c.l.b16 %v272
        %v2121 = vunpack.c.l.b16 %v273
        %v2122 = vunpack.c.l.b16 %v274
        %v2123 = vunpack.c.l.b16 %v275
        %v2124 = vunpack.c.l.b16 %v276
        %v2125 = vunpack.c.l.b16 %v277
        %v2126 = vunpack.c.l.b16 %v278
        %v2127 = vunpack.c.l.b16 %v279
        %v2128 = vunpack.c.l.b16 %v280
        %v2129 = vunpack.c.l.b16 %v281
        %v2130 = vunpack.c.l.b16 %v282
        %v2131 = vunpack.c.l.b16 %v283
        %v2132 = vunpack.c.l.b16 %v284
        %v2133 = vunpack.c.l.b16 %v285
        %v2134 = vpack.c.b16 %v2103, %v2102
        %v2135 = vpack.c.b16 %v2105, %v2104
        %v2136 = vpack.c.b16 %v2107, %v2106
        %v2137 = vpack.c.b16 %v2109, %v2108
        %v2138 = vpack.c.b16 %v2111, %v2110
        %v2139 = vpack.c.b16 %v2113, %v2112
        %v2140 = vpack.c.b16 %v2115, %v2114
        %v2141 = vpack.c.b16 %v2117, %v2116
        %v2142 = vpack.c.b16 %v2119, %v2118
        %v2143 = vpack.c.b16 %v2121, %v2120
        %v2144 = vpack.c.b16 %v2123, %v2122
        %v2145 = vpack.c.b16 %v2125, %v2124
        %v2146 = vpack.c.b16 %v2127, %v2126
        %v2147 = vpack.c.b16 %v2129, %v2128
        %v2148 = vpack.c.b16 %v2131, %v2130
        %v2149 = vpack.c.b16 %v2133, %v2132
        %v2150 = vunpack.c.l.b16 %v318
        %v2151 = vunpack.c.l.b16 %v328
        %v2152 = vunpack.c.l.b16 %v342
        %v2153 = vunpack.c.l.b16 %v352
        %v2154 = vunpack.c.l.b16 %v366
        %v2155 = vunpack.c.l.b16 %v376
        %v2156 = vunpack.c.l.b16 %v390
        %v2157 = vunpack.c.l.b16 %v400
        %v2158 = vunpack.c.l.b16 %v414
        %v2159 = vunpack.c.l.b16 %v424
        %v2160 = vunpack.c.l.b16 %v438
        %v2161 = vunpack.c.l.b16 %v448
        %v2162 = vunpack.c.l.b16 %v462
        %v2163 = vunpack.c.l.b16 %v472
        %v2164 = vunpack.c.l.b16 %v486
        %v2165 = vunpack.c.l.b16 %v496
        %v2166 = vunpack.c.l.b16 %v510
        %v2167 = vunpack.c.l.b16 %v520
        %v2168 = vunpack.c.l.b16 %v534
        %v2169 = vunpack.c.l.b16 %v544
        %v2170 = vunpack.c.l.b16 %v558
        %v2171 = vunpack.c.l.b16 %v568
        %v2172 = vunpack.c.l.b16 %v582
        %v2173 = vunpack.c.l.b16 %v592
        %v2174 = vunpack.c.l.b16 %v606
        %v2175 = vunpack.c.l.b16 %v616
        %v2176 = vunpack.c.l.b16 %v630
        %v2177 = vunpack.c.l.b16 %v640
        %v2178 = vunpack.c.l.b16 %v654
        %v2179 = vunpack.c.l.b16 %v664
        %v2180 = vunpack.c.l.b16 %v678
        %v2181 = vunpack.c.l.b16 %v688
        %v2182 = vpack.c.b16 %v2151, %v2150
        %v2183 = vpack.c.b16 %v2153, %v2152
        %v2184 = vpack.c.b16 %v2155, %v2154
        %v2185 = vpack.c.b16 %v2157, %v2156
        %v2186 = vpack.c.b16 %v2159, %v2158
        %v2187 = vpack.c.b16 %v2161, %v2160
        %v2188 = vpack.c.b16 %v2163, %v2162
        %v2189 = vpack.c.b16 %v2165, %v2164
        %v2190 = vpack.c.b16 %v2167, %v2166
        %v2191 = vpack.c.b16 %v2169, %v2168
        %v2192 = vpack.c.b16 %v2171, %v2170
        %v2193 = vpack.c.b16 %v2173, %v2172
        %v2194 = vpack.c.b16 %v2175, %v2174
        %v2195 = vpack.c.b16 %v2177, %v2176
        %v2196 = vpack.c.b16 %v2179, %v2178
        %v2197 = vpack.c.b16 %v2181, %v2180
        %2198 = vrot.lane.b32.xlu0 %v2182, 4
        %v2199 = vpop.permute.xlu0 %2198
        %2200 = vrot.lane.b32.xlu0 %v2183, 4
        %v2201 = vpop.permute.xlu0 %2200
        %2202 = vrot.lane.b32.xlu0 %v2184, 4
        %v2203 = vpop.permute.xlu0 %2202
        %2204 = vrot.lane.b32.xlu0 %v2185, 4
        %v2205 = vpop.permute.xlu0 %2204
        %2206 = vrot.lane.b32.xlu0 %v2186, 4
        %v2207 = vpop.permute.xlu0 %2206
        %2208 = vrot.lane.b32.xlu0 %v2187, 4
        %v2209 = vpop.permute.xlu0 %2208
        %2210 = vrot.lane.b32.xlu0 %v2188, 4
        %v2211 = vpop.permute.xlu0 %2210
        %2212 = vrot.lane.b32.xlu0 %v2189, 4
        %v2213 = vpop.permute.xlu0 %2212
        %2214 = vrot.lane.b32.xlu0 %v2190, 4
        %v2215 = vpop.permute.xlu0 %2214
        %2216 = vrot.lane.b32.xlu0 %v2191, 4
        %v2217 = vpop.permute.xlu0 %2216
        %2218 = vrot.lane.b32.xlu0 %v2192, 4
        %v2219 = vpop.permute.xlu0 %2218
        %2220 = vrot.lane.b32.xlu0 %v2193, 4
        %v2221 = vpop.permute.xlu0 %2220
        %2222 = vrot.lane.b32.xlu0 %v2194, 4
        %v2223 = vpop.permute.xlu0 %2222
        %2224 = vrot.lane.b32.xlu0 %v2195, 4
        %v2225 = vpop.permute.xlu0 %2224
        %2226 = vrot.lane.b32.xlu0 %v2196, 4
        %v2227 = vpop.permute.xlu0 %2226
        %2228 = vrot.lane.b32.xlu0 %v2197, 4
        %v2229 = vpop.permute.xlu0 %2228
        %v2230 = vunpack.c.l.b16 %v759
        %v2231 = vunpack.c.l.b16 %v762
        %v2232 = vunpack.c.l.b16 %v766
        %v2233 = vunpack.c.l.b16 %v769
        %v2234 = vunpack.c.l.b16 %v773
        %v2235 = vunpack.c.l.b16 %v776
        %v2236 = vunpack.c.l.b16 %v780
        %v2237 = vunpack.c.l.b16 %v783
        %v2238 = vunpack.c.l.b16 %v787
        %v2239 = vunpack.c.l.b16 %v790
        %v2240 = vunpack.c.l.b16 %v794
        %v2241 = vunpack.c.l.b16 %v797
        %v2242 = vunpack.c.l.b16 %v801
        %v2243 = vunpack.c.l.b16 %v804
        %v2244 = vunpack.c.l.b16 %v808
        %v2245 = vunpack.c.l.b16 %v811
        %v2246 = vunpack.c.l.b16 %v815
        %v2247 = vunpack.c.l.b16 %v818
        %v2248 = vunpack.c.l.b16 %v822
        %v2249 = vunpack.c.l.b16 %v825
        %v2250 = vunpack.c.l.b16 %v829
        %v2251 = vunpack.c.l.b16 %v832
        %v2252 = vunpack.c.l.b16 %v836
        %v2253 = vunpack.c.l.b16 %v839
        %v2254 = vunpack.c.l.b16 %v843
        %v2255 = vunpack.c.l.b16 %v846
        %v2256 = vunpack.c.l.b16 %v850
        %v2257 = vunpack.c.l.b16 %v853
        %v2258 = vunpack.c.l.b16 %v857
        %v2259 = vunpack.c.l.b16 %v860
        %v2260 = vunpack.c.l.b16 %v864
        %v2261 = vunpack.c.l.b16 %v867
        %v2262 = vpack.c.b16 %v2231, %v2230
        %v2263 = vpack.c.b16 %v2233, %v2232
        %v2264 = vpack.c.b16 %v2235, %v2234
        %v2265 = vpack.c.b16 %v2237, %v2236
        %v2266 = vpack.c.b16 %v2239, %v2238
        %v2267 = vpack.c.b16 %v2241, %v2240
        %v2268 = vpack.c.b16 %v2243, %v2242
        %v2269 = vpack.c.b16 %v2245, %v2244
        %v2270 = vpack.c.b16 %v2247, %v2246
        %v2271 = vpack.c.b16 %v2249, %v2248
        %v2272 = vpack.c.b16 %v2251, %v2250
        %v2273 = vpack.c.b16 %v2253, %v2252
        %v2274 = vpack.c.b16 %v2255, %v2254
        %v2275 = vpack.c.b16 %v2257, %v2256
        %v2276 = vpack.c.b16 %v2259, %v2258
        %v2277 = vpack.c.b16 %v2261, %v2260
        %2278 = vrot.lane.b32.xlu0 %v2262, 8
        %v2279 = vpop.permute.xlu0 %2278
        %2280 = vrot.lane.b32.xlu0 %v2263, 8
        %v2281 = vpop.permute.xlu0 %2280
        %2282 = vrot.lane.b32.xlu0 %v2264, 8
        %v2283 = vpop.permute.xlu0 %2282
        %2284 = vrot.lane.b32.xlu0 %v2265, 8
        %v2285 = vpop.permute.xlu0 %2284
        %2286 = vrot.lane.b32.xlu0 %v2266, 8
        %v2287 = vpop.permute.xlu0 %2286
        %2288 = vrot.lane.b32.xlu0 %v2267, 8
        %v2289 = vpop.permute.xlu0 %2288
        %2290 = vrot.lane.b32.xlu0 %v2268, 8
        %v2291 = vpop.permute.xlu0 %2290
        %2292 = vrot.lane.b32.xlu0 %v2269, 8
        %v2293 = vpop.permute.xlu0 %2292
        %2294 = vrot.lane.b32.xlu0 %v2270, 8
        %v2295 = vpop.permute.xlu0 %2294
        %2296 = vrot.lane.b32.xlu0 %v2271, 8
        %v2297 = vpop.permute.xlu0 %2296
        %2298 = vrot.lane.b32.xlu0 %v2272, 8
        %v2299 = vpop.permute.xlu0 %2298
        %2300 = vrot.lane.b32.xlu0 %v2273, 8
        %v2301 = vpop.permute.xlu0 %2300
        %2302 = vrot.lane.b32.xlu0 %v2274, 8
        %v2303 = vpop.permute.xlu0 %2302
        %2304 = vrot.lane.b32.xlu0 %v2275, 8
        %v2305 = vpop.permute.xlu0 %2304
        %2306 = vrot.lane.b32.xlu0 %v2276, 8
        %v2307 = vpop.permute.xlu0 %2306
        %2308 = vrot.lane.b32.xlu0 %v2277, 8
        %v2309 = vpop.permute.xlu0 %2308
        %v2326 = vunpack.c.l.b16 %v869
        %v2327 = vunpack.c.l.b16 %v870
        %v2328 = vunpack.c.l.b16 %v871
        %v2329 = vunpack.c.l.b16 %v872
        %v2330 = vunpack.c.l.b16 %v873
        %v2331 = vunpack.c.l.b16 %v874
        %v2332 = vunpack.c.l.b16 %v875
        %v2333 = vunpack.c.l.b16 %v876
        %v2334 = vunpack.c.l.b16 %v877
        %v2335 = vunpack.c.l.b16 %v878
        %v2336 = vunpack.c.l.b16 %v879
        %v2337 = vunpack.c.l.b16 %v880
        %v2338 = vunpack.c.l.b16 %v881
        %v2339 = vunpack.c.l.b16 %v882
        %v2340 = vunpack.c.l.b16 %v883
        %v2341 = vunpack.c.l.b16 %v884
        %v2342 = vunpack.c.l.b16 %v885
        %v2343 = vunpack.c.l.b16 %v886
        %v2344 = vunpack.c.l.b16 %v887
        %v2345 = vunpack.c.l.b16 %v888
        %v2346 = vunpack.c.l.b16 %v889
        %v2347 = vunpack.c.l.b16 %v890
        %v2348 = vunpack.c.l.b16 %v891
        %v2349 = vunpack.c.l.b16 %v892
        %v2350 = vunpack.c.l.b16 %v893
        %v2351 = vunpack.c.l.b16 %v894
        %v2352 = vunpack.c.l.b16 %v895
        %v2353 = vunpack.c.l.b16 %v896
        %v2354 = vunpack.c.l.b16 %v897
        %v2355 = vunpack.c.l.b16 %v898
        %v2356 = vunpack.c.l.b16 %v899
        %v2357 = vunpack.c.l.b16 %v900
        %v2358 = vpack.c.b16 %v2327, %v2326
        %v2359 = vpack.c.b16 %v2329, %v2328
        %v2360 = vpack.c.b16 %v2331, %v2330
        %v2361 = vpack.c.b16 %v2333, %v2332
        %v2362 = vpack.c.b16 %v2335, %v2334
        %v2363 = vpack.c.b16 %v2337, %v2336
        %v2364 = vpack.c.b16 %v2339, %v2338
        %v2365 = vpack.c.b16 %v2341, %v2340
        %v2366 = vpack.c.b16 %v2343, %v2342
        %v2367 = vpack.c.b16 %v2345, %v2344
        %v2368 = vpack.c.b16 %v2347, %v2346
        %v2369 = vpack.c.b16 %v2349, %v2348
        %v2370 = vpack.c.b16 %v2351, %v2350
        %v2371 = vpack.c.b16 %v2353, %v2352
        %v2372 = vpack.c.b16 %v2355, %v2354
        %v2373 = vpack.c.b16 %v2357, %v2356
        %2374 = vrot.lane.b32.xlu0 %v2358, 12
        %v2375 = vpop.permute.xlu0 %2374
        %2376 = vrot.lane.b32.xlu0 %v2359, 12
        %v2377 = vpop.permute.xlu0 %2376
        %2378 = vrot.lane.b32.xlu0 %v2360, 12
        %v2379 = vpop.permute.xlu0 %2378
        %2380 = vrot.lane.b32.xlu0 %v2361, 12
        %v2381 = vpop.permute.xlu0 %2380
        %2382 = vrot.lane.b32.xlu0 %v2362, 12
        %v2383 = vpop.permute.xlu0 %2382
        %2384 = vrot.lane.b32.xlu0 %v2363, 12
        %v2385 = vpop.permute.xlu0 %2384
        %2386 = vrot.lane.b32.xlu0 %v2364, 12
        %v2387 = vpop.permute.xlu0 %2386
        %2388 = vrot.lane.b32.xlu0 %v2365, 12
        %v2389 = vpop.permute.xlu0 %2388
        %2390 = vrot.lane.b32.xlu0 %v2366, 12
        %v2391 = vpop.permute.xlu0 %2390
        %2392 = vrot.lane.b32.xlu0 %v2367, 12
        %v2393 = vpop.permute.xlu0 %2392
        %2394 = vrot.lane.b32.xlu0 %v2368, 12
        %v2395 = vpop.permute.xlu0 %2394
        %2396 = vrot.lane.b32.xlu0 %v2369, 12
        %v2397 = vpop.permute.xlu0 %2396
        %2398 = vrot.lane.b32.xlu0 %v2370, 12
        %v2399 = vpop.permute.xlu0 %2398
        %2400 = vrot.lane.b32.xlu0 %v2371, 12
        %v2401 = vpop.permute.xlu0 %2400
        %2402 = vrot.lane.b32.xlu0 %v2372, 12
        %v2403 = vpop.permute.xlu0 %2402
        %2404 = vrot.lane.b32.xlu0 %v2373, 12
        %v2405 = vpop.permute.xlu0 %2404
        %v2406 = vunpack.c.l.b16 %v930
        %v2407 = vunpack.c.l.b16 %v940
        %v2408 = vunpack.c.l.b16 %v954
        %v2409 = vunpack.c.l.b16 %v964
        %v2410 = vunpack.c.l.b16 %v978
        %v2411 = vunpack.c.l.b16 %v988
        %v2412 = vunpack.c.l.b16 %v1002
        %v2413 = vunpack.c.l.b16 %v1012
        %v2414 = vunpack.c.l.b16 %v1026
        %v2415 = vunpack.c.l.b16 %v1036
        %v2416 = vunpack.c.l.b16 %v1050
        %v2417 = vunpack.c.l.b16 %v1060
        %v2418 = vunpack.c.l.b16 %v1074
        %v2419 = vunpack.c.l.b16 %v1084
        %v2420 = vunpack.c.l.b16 %v1098
        %v2421 = vunpack.c.l.b16 %v1108
        %v2422 = vunpack.c.l.b16 %v1122
        %v2423 = vunpack.c.l.b16 %v1132
        %v2424 = vunpack.c.l.b16 %v1146
        %v2425 = vunpack.c.l.b16 %v1156
        %v2426 = vunpack.c.l.b16 %v1170
        %v2427 = vunpack.c.l.b16 %v1180
        %v2428 = vunpack.c.l.b16 %v1194
        %v2429 = vunpack.c.l.b16 %v1204
        %v2430 = vunpack.c.l.b16 %v1218
        %v2431 = vunpack.c.l.b16 %v1228
        %v2432 = vunpack.c.l.b16 %v1242
        %v2433 = vunpack.c.l.b16 %v1252
        %v2434 = vunpack.c.l.b16 %v1266
        %v2435 = vunpack.c.l.b16 %v1276
        %v2436 = vunpack.c.l.b16 %v1290
        %v2437 = vunpack.c.l.b16 %v1300
        %v2438 = vpack.c.b16 %v2407, %v2406
        %v2439 = vpack.c.b16 %v2409, %v2408
        %v2440 = vpack.c.b16 %v2411, %v2410
        %v2441 = vpack.c.b16 %v2413, %v2412
        %v2442 = vpack.c.b16 %v2415, %v2414
        %v2443 = vpack.c.b16 %v2417, %v2416
        %v2444 = vpack.c.b16 %v2419, %v2418
        %v2445 = vpack.c.b16 %v2421, %v2420
        %v2446 = vpack.c.b16 %v2423, %v2422
        %v2447 = vpack.c.b16 %v2425, %v2424
        %v2448 = vpack.c.b16 %v2427, %v2426
        %v2449 = vpack.c.b16 %v2429, %v2428
        %v2450 = vpack.c.b16 %v2431, %v2430
        %v2451 = vpack.c.b16 %v2433, %v2432
        %v2452 = vpack.c.b16 %v2435, %v2434
        %v2453 = vpack.c.b16 %v2437, %v2436
        %2454 = vrot.lane.b32.xlu0 %v2438, 16
        %v2455 = vpop.permute.xlu0 %2454
        %2456 = vrot.lane.b32.xlu0 %v2439, 16
        %v2457 = vpop.permute.xlu0 %2456
        %2458 = vrot.lane.b32.xlu0 %v2440, 16
        %v2459 = vpop.permute.xlu0 %2458
        %2460 = vrot.lane.b32.xlu0 %v2441, 16
        %v2461 = vpop.permute.xlu0 %2460
        %2462 = vrot.lane.b32.xlu0 %v2442, 16
        %v2463 = vpop.permute.xlu0 %2462
        %2464 = vrot.lane.b32.xlu0 %v2443, 16
        %v2465 = vpop.permute.xlu0 %2464
        %2466 = vrot.lane.b32.xlu0 %v2444, 16
        %v2467 = vpop.permute.xlu0 %2466
        %2468 = vrot.lane.b32.xlu0 %v2445, 16
        %v2469 = vpop.permute.xlu0 %2468
        %2470 = vrot.lane.b32.xlu0 %v2446, 16
        %v2471 = vpop.permute.xlu0 %2470
        %2472 = vrot.lane.b32.xlu0 %v2447, 16
        %v2473 = vpop.permute.xlu0 %2472
        %2474 = vrot.lane.b32.xlu0 %v2448, 16
        %v2475 = vpop.permute.xlu0 %2474
        %2476 = vrot.lane.b32.xlu0 %v2449, 16
        %v2477 = vpop.permute.xlu0 %2476
        %2478 = vrot.lane.b32.xlu0 %v2450, 16
        %v2479 = vpop.permute.xlu0 %2478
        %2480 = vrot.lane.b32.xlu0 %v2451, 16
        %v2481 = vpop.permute.xlu0 %2480
        %2482 = vrot.lane.b32.xlu0 %v2452, 16
        %v2483 = vpop.permute.xlu0 %2482
        %2484 = vrot.lane.b32.xlu0 %v2453, 16
        %v2485 = vpop.permute.xlu0 %2484
        %v2486 = vunpack.c.l.b16 %v1368
        %v2487 = vunpack.c.l.b16 %v1371
        %v2488 = vunpack.c.l.b16 %v1375
        %v2489 = vunpack.c.l.b16 %v1378
        %v2490 = vunpack.c.l.b16 %v1382
        %v2491 = vunpack.c.l.b16 %v1385
        %v2492 = vunpack.c.l.b16 %v1389
        %v2493 = vunpack.c.l.b16 %v1392
        %v2494 = vunpack.c.l.b16 %v1396
        %v2495 = vunpack.c.l.b16 %v1399
        %v2496 = vunpack.c.l.b16 %v1403
        %v2497 = vunpack.c.l.b16 %v1406
        %v2498 = vunpack.c.l.b16 %v1410
        %v2499 = vunpack.c.l.b16 %v1413
        %v2500 = vunpack.c.l.b16 %v1417
        %v2501 = vunpack.c.l.b16 %v1420
        %v2502 = vunpack.c.l.b16 %v1424
        %v2503 = vunpack.c.l.b16 %v1427
        %v2504 = vunpack.c.l.b16 %v1431
        %v2505 = vunpack.c.l.b16 %v1434
        %v2506 = vunpack.c.l.b16 %v1438
        %v2507 = vunpack.c.l.b16 %v1441
        %v2508 = vunpack.c.l.b16 %v1445
        %v2509 = vunpack.c.l.b16 %v1448
        %v2510 = vunpack.c.l.b16 %v1452
        %v2511 = vunpack.c.l.b16 %v1455
        %v2512 = vunpack.c.l.b16 %v1459
        %v2513 = vunpack.c.l.b16 %v1462
        %v2514 = vunpack.c.l.b16 %v1466
        %v2515 = vunpack.c.l.b16 %v1469
        %v2516 = vunpack.c.l.b16 %v1473
        %v2517 = vunpack.c.l.b16 %v1476
        %v2518 = vpack.c.b16 %v2487, %v2486
        %v2519 = vpack.c.b16 %v2489, %v2488
        %v2520 = vpack.c.b16 %v2491, %v2490
        %v2521 = vpack.c.b16 %v2493, %v2492
        %v2522 = vpack.c.b16 %v2495, %v2494
        %v2523 = vpack.c.b16 %v2497, %v2496
        %v2524 = vpack.c.b16 %v2499, %v2498
        %v2525 = vpack.c.b16 %v2501, %v2500
        %v2526 = vpack.c.b16 %v2503, %v2502
        %v2527 = vpack.c.b16 %v2505, %v2504
        %v2528 = vpack.c.b16 %v2507, %v2506
        %v2529 = vpack.c.b16 %v2509, %v2508
        %v2530 = vpack.c.b16 %v2511, %v2510
        %v2531 = vpack.c.b16 %v2513, %v2512
        %v2532 = vpack.c.b16 %v2515, %v2514
        %v2533 = vpack.c.b16 %v2517, %v2516
        %2534 = vrot.lane.b32.xlu0 %v2518, 20
        %v2535 = vpop.permute.xlu0 %2534
        %2536 = vrot.lane.b32.xlu0 %v2519, 20
        %v2537 = vpop.permute.xlu0 %2536
        %2538 = vrot.lane.b32.xlu0 %v2520, 20
        %v2539 = vpop.permute.xlu0 %2538
        %2540 = vrot.lane.b32.xlu0 %v2521, 20
        %v2541 = vpop.permute.xlu0 %2540
        %2542 = vrot.lane.b32.xlu0 %v2522, 20
        %v2543 = vpop.permute.xlu0 %2542
        %2544 = vrot.lane.b32.xlu0 %v2523, 20
        %v2545 = vpop.permute.xlu0 %2544
        %2546 = vrot.lane.b32.xlu0 %v2524, 20
        %v2547 = vpop.permute.xlu0 %2546
        %2548 = vrot.lane.b32.xlu0 %v2525, 20
        %v2549 = vpop.permute.xlu0 %2548
        %2550 = vrot.lane.b32.xlu0 %v2526, 20
        %v2551 = vpop.permute.xlu0 %2550
        %2552 = vrot.lane.b32.xlu0 %v2527, 20
        %v2553 = vpop.permute.xlu0 %2552
        %2554 = vrot.lane.b32.xlu0 %v2528, 20
        %v2555 = vpop.permute.xlu0 %2554
        %2556 = vrot.lane.b32.xlu0 %v2529, 20
        %v2557 = vpop.permute.xlu0 %2556
        %2558 = vrot.lane.b32.xlu0 %v2530, 20
        %v2559 = vpop.permute.xlu0 %2558
        %2560 = vrot.lane.b32.xlu0 %v2531, 20
        %v2561 = vpop.permute.xlu0 %2560
        %2562 = vrot.lane.b32.xlu0 %v2532, 20
        %v2563 = vpop.permute.xlu0 %2562
        %2564 = vrot.lane.b32.xlu0 %v2533, 20
        %v2565 = vpop.permute.xlu0 %2564
        %v2582 = vunpack.c.l.b16 %v1478
        %v2583 = vunpack.c.l.b16 %v1479
        %v2584 = vunpack.c.l.b16 %v1480
        %v2585 = vunpack.c.l.b16 %v1481
        %v2586 = vunpack.c.l.b16 %v1482
        %v2587 = vunpack.c.l.b16 %v1483
        %v2588 = vunpack.c.l.b16 %v1484
        %v2589 = vunpack.c.l.b16 %v1485
        %v2590 = vunpack.c.l.b16 %v1486
        %v2591 = vunpack.c.l.b16 %v1487
        %v2592 = vunpack.c.l.b16 %v1488
        %v2593 = vunpack.c.l.b16 %v1489
        %v2594 = vunpack.c.l.b16 %v1490
        %v2595 = vunpack.c.l.b16 %v1491
        %v2596 = vunpack.c.l.b16 %v1492
        %v2597 = vunpack.c.l.b16 %v1493
        %v2598 = vunpack.c.l.b16 %v1494
        %v2599 = vunpack.c.l.b16 %v1495
        %v2600 = vunpack.c.l.b16 %v1496
        %v2601 = vunpack.c.l.b16 %v1497
        %v2602 = vunpack.c.l.b16 %v1498
        %v2603 = vunpack.c.l.b16 %v1499
        %v2604 = vunpack.c.l.b16 %v1500
        %v2605 = vunpack.c.l.b16 %v1501
        %v2606 = vunpack.c.l.b16 %v1502
        %v2607 = vunpack.c.l.b16 %v1503
        %v2608 = vunpack.c.l.b16 %v1504
        %v2609 = vunpack.c.l.b16 %v1505
        %v2610 = vunpack.c.l.b16 %v1506
        %v2611 = vunpack.c.l.b16 %v1507
        %v2612 = vunpack.c.l.b16 %v1508
        %v2613 = vunpack.c.l.b16 %v1509
        %v2614 = vpack.c.b16 %v2583, %v2582
        %v2615 = vpack.c.b16 %v2585, %v2584
        %v2616 = vpack.c.b16 %v2587, %v2586
        %v2617 = vpack.c.b16 %v2589, %v2588
        %v2618 = vpack.c.b16 %v2591, %v2590
        %v2619 = vpack.c.b16 %v2593, %v2592
        %v2620 = vpack.c.b16 %v2595, %v2594
        %v2621 = vpack.c.b16 %v2597, %v2596
        %v2622 = vpack.c.b16 %v2599, %v2598
        %v2623 = vpack.c.b16 %v2601, %v2600
        %v2624 = vpack.c.b16 %v2603, %v2602
        %v2625 = vpack.c.b16 %v2605, %v2604
        %v2626 = vpack.c.b16 %v2607, %v2606
        %v2627 = vpack.c.b16 %v2609, %v2608
        %v2628 = vpack.c.b16 %v2611, %v2610
        %v2629 = vpack.c.b16 %v2613, %v2612
        %2630 = vrot.lane.b32.xlu0 %v2614, 24
        %v2631 = vpop.permute.xlu0 %2630
        %2632 = vrot.lane.b32.xlu0 %v2615, 24
        %v2633 = vpop.permute.xlu0 %2632
        %2634 = vrot.lane.b32.xlu0 %v2616, 24
        %v2635 = vpop.permute.xlu0 %2634
        %2636 = vrot.lane.b32.xlu0 %v2617, 24
        %v2637 = vpop.permute.xlu0 %2636
        %2638 = vrot.lane.b32.xlu0 %v2618, 24
        %v2639 = vpop.permute.xlu0 %2638
        %2640 = vrot.lane.b32.xlu0 %v2619, 24
        %v2641 = vpop.permute.xlu0 %2640
        %2642 = vrot.lane.b32.xlu0 %v2620, 24
        %v2643 = vpop.permute.xlu0 %2642
        %2644 = vrot.lane.b32.xlu0 %v2621, 24
        %v2645 = vpop.permute.xlu0 %2644
        %2646 = vrot.lane.b32.xlu0 %v2622, 24
        %v2647 = vpop.permute.xlu0 %2646
        %2648 = vrot.lane.b32.xlu0 %v2623, 24
        %v2649 = vpop.permute.xlu0 %2648
        %2650 = vrot.lane.b32.xlu0 %v2624, 24
        %v2651 = vpop.permute.xlu0 %2650
        %2652 = vrot.lane.b32.xlu0 %v2625, 24
        %v2653 = vpop.permute.xlu0 %2652
        %2654 = vrot.lane.b32.xlu0 %v2626, 24
        %v2655 = vpop.permute.xlu0 %2654
        %2656 = vrot.lane.b32.xlu0 %v2627, 24
        %v2657 = vpop.permute.xlu0 %2656
        %2658 = vrot.lane.b32.xlu0 %v2628, 24
        %v2659 = vpop.permute.xlu0 %2658
        %2660 = vrot.lane.b32.xlu0 %v2629, 24
        %v2661 = vpop.permute.xlu0 %2660
        %v2662 = vunpack.c.l.b16 %v1539
        %v2663 = vunpack.c.l.b16 %v1549
        %v2664 = vunpack.c.l.b16 %v1563
        %v2665 = vunpack.c.l.b16 %v1573
        %v2666 = vunpack.c.l.b16 %v1587
        %v2667 = vunpack.c.l.b16 %v1597
        %v2668 = vunpack.c.l.b16 %v1611
        %v2669 = vunpack.c.l.b16 %v1621
        %v2670 = vunpack.c.l.b16 %v1635
        %v2671 = vunpack.c.l.b16 %v1645
        %v2672 = vunpack.c.l.b16 %v1659
        %v2673 = vunpack.c.l.b16 %v1669
        %v2674 = vunpack.c.l.b16 %v1683
        %v2675 = vunpack.c.l.b16 %v1693
        %v2676 = vunpack.c.l.b16 %v1707
        %v2677 = vunpack.c.l.b16 %v1717
        %v2678 = vunpack.c.l.b16 %v1731
        %v2679 = vunpack.c.l.b16 %v1741
        %v2680 = vunpack.c.l.b16 %v1755
        %v2681 = vunpack.c.l.b16 %v1765
        %v2682 = vunpack.c.l.b16 %v1779
        %v2683 = vunpack.c.l.b16 %v1789
        %v2684 = vunpack.c.l.b16 %v1803
        %v2685 = vunpack.c.l.b16 %v1813
        %v2686 = vunpack.c.l.b16 %v1827
        %v2687 = vunpack.c.l.b16 %v1837
        %v2688 = vunpack.c.l.b16 %v1851
        %v2689 = vunpack.c.l.b16 %v1861
        %v2690 = vunpack.c.l.b16 %v1875
        %v2691 = vunpack.c.l.b16 %v1885
        %v2692 = vunpack.c.l.b16 %v1899
        %v2693 = vunpack.c.l.b16 %v1909
        %v2694 = vpack.c.b16 %v2663, %v2662
        %v2695 = vpack.c.b16 %v2665, %v2664
        %v2696 = vpack.c.b16 %v2667, %v2666
        %v2697 = vpack.c.b16 %v2669, %v2668
        %v2698 = vpack.c.b16 %v2671, %v2670
        %v2699 = vpack.c.b16 %v2673, %v2672
        %v2700 = vpack.c.b16 %v2675, %v2674
        %v2701 = vpack.c.b16 %v2677, %v2676
        %v2702 = vpack.c.b16 %v2679, %v2678
        %v2703 = vpack.c.b16 %v2681, %v2680
        %v2704 = vpack.c.b16 %v2683, %v2682
        %v2705 = vpack.c.b16 %v2685, %v2684
        %v2706 = vpack.c.b16 %v2687, %v2686
        %v2707 = vpack.c.b16 %v2689, %v2688
        %v2708 = vpack.c.b16 %v2691, %v2690
        %v2709 = vpack.c.b16 %v2693, %v2692
        %2710 = vrot.lane.b32.xlu0 %v2694, 28
        %v2711 = vpop.permute.xlu0 %2710
        %2712 = vrot.lane.b32.xlu0 %v2695, 28
        %v2713 = vpop.permute.xlu0 %2712
        %2714 = vrot.lane.b32.xlu0 %v2696, 28
        %v2715 = vpop.permute.xlu0 %2714
        %2716 = vrot.lane.b32.xlu0 %v2697, 28
        %v2717 = vpop.permute.xlu0 %2716
        %2718 = vrot.lane.b32.xlu0 %v2698, 28
        %v2719 = vpop.permute.xlu0 %2718
        %2720 = vrot.lane.b32.xlu0 %v2699, 28
        %v2721 = vpop.permute.xlu0 %2720
        %2722 = vrot.lane.b32.xlu0 %v2700, 28
        %v2723 = vpop.permute.xlu0 %2722
        %2724 = vrot.lane.b32.xlu0 %v2701, 28
        %v2725 = vpop.permute.xlu0 %2724
        %2726 = vrot.lane.b32.xlu0 %v2702, 28
        %v2727 = vpop.permute.xlu0 %2726
        %2728 = vrot.lane.b32.xlu0 %v2703, 28
        %v2729 = vpop.permute.xlu0 %2728
        %2730 = vrot.lane.b32.xlu0 %v2704, 28
        %v2731 = vpop.permute.xlu0 %2730
        %2732 = vrot.lane.b32.xlu0 %v2705, 28
        %v2733 = vpop.permute.xlu0 %2732
        %2734 = vrot.lane.b32.xlu0 %v2706, 28
        %v2735 = vpop.permute.xlu0 %2734
        %2736 = vrot.lane.b32.xlu0 %v2707, 28
        %v2737 = vpop.permute.xlu0 %2736
        %2738 = vrot.lane.b32.xlu0 %v2708, 28
        %v2739 = vpop.permute.xlu0 %2738
        %2740 = vrot.lane.b32.xlu0 %v2709, 28
        %v2741 = vpop.permute.xlu0 %2740
        %v2742 = vunpack.c.l.b16 %v1977
        %v2743 = vunpack.c.l.b16 %v1980
        %v2744 = vunpack.c.l.b16 %v1984
        %v2745 = vunpack.c.l.b16 %v1987
        %v2746 = vunpack.c.l.b16 %v1991
        %v2747 = vunpack.c.l.b16 %v1994
        %v2748 = vunpack.c.l.b16 %v1998
        %v2749 = vunpack.c.l.b16 %v2001
        %v2750 = vunpack.c.l.b16 %v2005
        %v2751 = vunpack.c.l.b16 %v2008
        %v2752 = vunpack.c.l.b16 %v2012
        %v2753 = vunpack.c.l.b16 %v2015
        %v2754 = vunpack.c.l.b16 %v2019
        %v2755 = vunpack.c.l.b16 %v2022
        %v2756 = vunpack.c.l.b16 %v2026
        %v2757 = vunpack.c.l.b16 %v2029
        %v2758 = vunpack.c.l.b16 %v2033
        %v2759 = vunpack.c.l.b16 %v2036
        %v2760 = vunpack.c.l.b16 %v2040
        %v2761 = vunpack.c.l.b16 %v2043
        %v2762 = vunpack.c.l.b16 %v2047
        %v2763 = vunpack.c.l.b16 %v2050
        %v2764 = vunpack.c.l.b16 %v2054
        %v2765 = vunpack.c.l.b16 %v2057
        %v2766 = vunpack.c.l.b16 %v2061
        %v2767 = vunpack.c.l.b16 %v2064
        %v2768 = vunpack.c.l.b16 %v2068
        %v2769 = vunpack.c.l.b16 %v2071
        %v2770 = vunpack.c.l.b16 %v2075
        %v2771 = vunpack.c.l.b16 %v2078
        %v2772 = vunpack.c.l.b16 %v2082
        %v2773 = vunpack.c.l.b16 %v2085
        %v2774 = vpack.c.b16 %v2743, %v2742
        %v2775 = vpack.c.b16 %v2745, %v2744
        %v2776 = vpack.c.b16 %v2747, %v2746
        %v2777 = vpack.c.b16 %v2749, %v2748
        %v2778 = vpack.c.b16 %v2751, %v2750
        %v2779 = vpack.c.b16 %v2753, %v2752
        %v2780 = vpack.c.b16 %v2755, %v2754
        %v2781 = vpack.c.b16 %v2757, %v2756
        %v2782 = vpack.c.b16 %v2759, %v2758
        %v2783 = vpack.c.b16 %v2761, %v2760
        %v2784 = vpack.c.b16 %v2763, %v2762
        %v2785 = vpack.c.b16 %v2765, %v2764
        %v2786 = vpack.c.b16 %v2767, %v2766
        %v2787 = vpack.c.b16 %v2769, %v2768
        %v2788 = vpack.c.b16 %v2771, %v2770
        %v2789 = vpack.c.b16 %v2773, %v2772
        %2790 = vrot.lane.b32.xlu0 %v2774, 32
        %v2791 = vpop.permute.xlu0 %2790
        %2792 = vrot.lane.b32.xlu0 %v2775, 32
        %v2793 = vpop.permute.xlu0 %2792
        %2794 = vrot.lane.b32.xlu0 %v2776, 32
        %v2795 = vpop.permute.xlu0 %2794
        %2796 = vrot.lane.b32.xlu0 %v2777, 32
        %v2797 = vpop.permute.xlu0 %2796
        %2798 = vrot.lane.b32.xlu0 %v2778, 32
        %v2799 = vpop.permute.xlu0 %2798
        %2800 = vrot.lane.b32.xlu0 %v2779, 32
        %v2801 = vpop.permute.xlu0 %2800
        %2802 = vrot.lane.b32.xlu0 %v2780, 32
        %v2803 = vpop.permute.xlu0 %2802
        %2804 = vrot.lane.b32.xlu0 %v2781, 32
        %v2805 = vpop.permute.xlu0 %2804
        %2806 = vrot.lane.b32.xlu0 %v2782, 32
        %v2807 = vpop.permute.xlu0 %2806
        %2808 = vrot.lane.b32.xlu0 %v2783, 32
        %v2809 = vpop.permute.xlu0 %2808
        %2810 = vrot.lane.b32.xlu0 %v2784, 32
        %v2811 = vpop.permute.xlu0 %2810
        %2812 = vrot.lane.b32.xlu0 %v2785, 32
        %v2813 = vpop.permute.xlu0 %2812
        %2814 = vrot.lane.b32.xlu0 %v2786, 32
        %v2815 = vpop.permute.xlu0 %2814
        %2816 = vrot.lane.b32.xlu0 %v2787, 32
        %v2817 = vpop.permute.xlu0 %2816
        %2818 = vrot.lane.b32.xlu0 %v2788, 32
        %v2819 = vpop.permute.xlu0 %2818
        %2820 = vrot.lane.b32.xlu0 %v2789, 32
        %v2821 = vpop.permute.xlu0 %2820
        %vm2822 = vcmask 31744
        %v2825 = vsel %vm2822, %v2134, %v2199
        %v2828 = vsel %vm2822, %v2135, %v2201
        %v2831 = vsel %vm2822, %v2136, %v2203
        %v2834 = vsel %vm2822, %v2137, %v2205
        %v2837 = vsel %vm2822, %v2138, %v2207
        %v2840 = vsel %vm2822, %v2139, %v2209
        %v2843 = vsel %vm2822, %v2140, %v2211
        %v2846 = vsel %vm2822, %v2141, %v2213
        %v2849 = vsel %vm2822, %v2142, %v2215
        %v2852 = vsel %vm2822, %v2143, %v2217
        %v2855 = vsel %vm2822, %v2144, %v2219
        %v2858 = vsel %vm2822, %v2145, %v2221
        %v2861 = vsel %vm2822, %v2146, %v2223
        %v2864 = vsel %vm2822, %v2147, %v2225
        %v2867 = vsel %vm2822, %v2148, %v2227
        %v2870 = vsel %vm2822, %v2149, %v2229
        %vm2871 = vcmask 64512
        %v2873 = vsel %vm2871, %v2825, %v2279
        %v2875 = vsel %vm2871, %v2828, %v2281
        %v2877 = vsel %vm2871, %v2831, %v2283
        %v2879 = vsel %vm2871, %v2834, %v2285
        %v2881 = vsel %vm2871, %v2837, %v2287
        %v2883 = vsel %vm2871, %v2840, %v2289
        %v2885 = vsel %vm2871, %v2843, %v2291
        %v2887 = vsel %vm2871, %v2846, %v2293
        %v2889 = vsel %vm2871, %v2849, %v2295
        %v2891 = vsel %vm2871, %v2852, %v2297
        %v2893 = vsel %vm2871, %v2855, %v2299
        %v2895 = vsel %vm2871, %v2858, %v2301
        %v2897 = vsel %vm2871, %v2861, %v2303
        %v2899 = vsel %vm2871, %v2864, %v2305
        %v2901 = vsel %vm2871, %v2867, %v2307
        %v2903 = vsel %vm2871, %v2870, %v2309
        %vm2904 = vcmask 97280
        %v2906 = vsel %vm2904, %v2873, %v2375
        %v2908 = vsel %vm2904, %v2875, %v2377
        %v2910 = vsel %vm2904, %v2877, %v2379
        %v2912 = vsel %vm2904, %v2879, %v2381
        %v2914 = vsel %vm2904, %v2881, %v2383
        %v2916 = vsel %vm2904, %v2883, %v2385
        %v2918 = vsel %vm2904, %v2885, %v2387
        %v2920 = vsel %vm2904, %v2887, %v2389
        %v2922 = vsel %vm2904, %v2889, %v2391
        %v2924 = vsel %vm2904, %v2891, %v2393
        %v2926 = vsel %vm2904, %v2893, %v2395
        %v2928 = vsel %vm2904, %v2895, %v2397
        %v2930 = vsel %vm2904, %v2897, %v2399
        %v2932 = vsel %vm2904, %v2899, %v2401
        %v2934 = vsel %vm2904, %v2901, %v2403
        %v2936 = vsel %vm2904, %v2903, %v2405
        %vm2937 = vcmask 130048
        %v2939 = vsel %vm2937, %v2906, %v2455
        %v2941 = vsel %vm2937, %v2908, %v2457
        %v2943 = vsel %vm2937, %v2910, %v2459
        %v2945 = vsel %vm2937, %v2912, %v2461
        %v2947 = vsel %vm2937, %v2914, %v2463
        %v2949 = vsel %vm2937, %v2916, %v2465
        %v2951 = vsel %vm2937, %v2918, %v2467
        %v2953 = vsel %vm2937, %v2920, %v2469
        %v2955 = vsel %vm2937, %v2922, %v2471
        %v2957 = vsel %vm2937, %v2924, %v2473
        %v2959 = vsel %vm2937, %v2926, %v2475
        %v2961 = vsel %vm2937, %v2928, %v2477
        %v2963 = vsel %vm2937, %v2930, %v2479
        %v2965 = vsel %vm2937, %v2932, %v2481
        %v2967 = vsel %vm2937, %v2934, %v2483
        %v2969 = vsel %vm2937, %v2936, %v2485
        %vm2970 = vcmask 162816
        %v2972 = vsel %vm2970, %v2939, %v2535
        %v2974 = vsel %vm2970, %v2941, %v2537
        %v2976 = vsel %vm2970, %v2943, %v2539
        %v2978 = vsel %vm2970, %v2945, %v2541
        %v2980 = vsel %vm2970, %v2947, %v2543
        %v2982 = vsel %vm2970, %v2949, %v2545
        %v2984 = vsel %vm2970, %v2951, %v2547
        %v2986 = vsel %vm2970, %v2953, %v2549
        %v2988 = vsel %vm2970, %v2955, %v2551
        %v2990 = vsel %vm2970, %v2957, %v2553
        %v2992 = vsel %vm2970, %v2959, %v2555
        %v2994 = vsel %vm2970, %v2961, %v2557
        %v2996 = vsel %vm2970, %v2963, %v2559
        %v2998 = vsel %vm2970, %v2965, %v2561
        %v3000 = vsel %vm2970, %v2967, %v2563
        %v3002 = vsel %vm2970, %v2969, %v2565
        %vm3003 = vcmask 195584
        %v3005 = vsel %vm3003, %v2972, %v2631
        %v3007 = vsel %vm3003, %v2974, %v2633
        %v3009 = vsel %vm3003, %v2976, %v2635
        %v3011 = vsel %vm3003, %v2978, %v2637
        %v3013 = vsel %vm3003, %v2980, %v2639
        %v3015 = vsel %vm3003, %v2982, %v2641
        %v3017 = vsel %vm3003, %v2984, %v2643
        %v3019 = vsel %vm3003, %v2986, %v2645
        %v3021 = vsel %vm3003, %v2988, %v2647
        %v3023 = vsel %vm3003, %v2990, %v2649
        %v3025 = vsel %vm3003, %v2992, %v2651
        %v3027 = vsel %vm3003, %v2994, %v2653
        %v3029 = vsel %vm3003, %v2996, %v2655
        %v3031 = vsel %vm3003, %v2998, %v2657
        %v3033 = vsel %vm3003, %v3000, %v2659
        %v3035 = vsel %vm3003, %v3002, %v2661
        %vm3036 = vcmask 228352
        %v3038 = vsel %vm3036, %v3005, %v2711
        %v3040 = vsel %vm3036, %v3007, %v2713
        %v3042 = vsel %vm3036, %v3009, %v2715
        %v3044 = vsel %vm3036, %v3011, %v2717
        %v3046 = vsel %vm3036, %v3013, %v2719
        %v3048 = vsel %vm3036, %v3015, %v2721
        %v3050 = vsel %vm3036, %v3017, %v2723
        %v3052 = vsel %vm3036, %v3019, %v2725
        %v3054 = vsel %vm3036, %v3021, %v2727
        %v3056 = vsel %vm3036, %v3023, %v2729
        %v3058 = vsel %vm3036, %v3025, %v2731
        %v3060 = vsel %vm3036, %v3027, %v2733
        %v3062 = vsel %vm3036, %v3029, %v2735
        %v3064 = vsel %vm3036, %v3031, %v2737
        %v3066 = vsel %vm3036, %v3033, %v2739
        %v3068 = vsel %vm3036, %v3035, %v2741
        %vm3069 = vcmask 261120
        %v3071 = vsel %vm3069, %v3038, %v2791
        %v3074 = vsel %vm3069, %v3040, %v2793
        %v3077 = vsel %vm3069, %v3042, %v2795
        %v3080 = vsel %vm3069, %v3044, %v2797
        %v3083 = vsel %vm3069, %v3046, %v2799
        %v3086 = vsel %vm3069, %v3048, %v2801
        %v3089 = vsel %vm3069, %v3050, %v2803
        %v3092 = vsel %vm3069, %v3052, %v2805
        %v3095 = vsel %vm3069, %v3054, %v2807
        %v3098 = vsel %vm3069, %v3056, %v2809
        %v3101 = vsel %vm3069, %v3058, %v2811
        %v3104 = vsel %vm3069, %v3060, %v2813
        %v3107 = vsel %vm3069, %v3062, %v2815
        %v3110 = vsel %vm3069, %v3064, %v2817
        %v3113 = vsel %vm3069, %v3066, %v2819
        %v3116 = vsel %vm3069, %v3068, %v2821
        %vm3118 = vcmask 293888
        %3119 = vst.msk [vmem:[#allocation2] sm:$0xff] %vm3118, %v3071
        %3120 = vst.msk [vmem:[#allocation2 + $0x8] sm:$0xff] %vm3118, %v3074
        %3121 = vst.msk [vmem:[#allocation2 + $0x10] sm:$0xff] %vm3118, %v3077
        %3122 = vst.msk [vmem:[#allocation2 + $0x18] sm:$0xff] %vm3118, %v3080
        %3123 = vst.msk [vmem:[#allocation2 + $0x20] sm:$0xff] %vm3118, %v3083
        %3124 = vst.msk [vmem:[#allocation2 + $0x28] sm:$0xff] %vm3118, %v3086
        %3125 = vst.msk [vmem:[#allocation2 + $0x30] sm:$0xff] %vm3118, %v3089
        %3126 = vst.msk [vmem:[#allocation2 + $0x38] sm:$0xff] %vm3118, %v3092
        %3127 = vst.msk [vmem:[#allocation2 + $0x40] sm:$0xff] %vm3118, %v3095
        %3128 = vst.msk [vmem:[#allocation2 + $0x48] sm:$0xff] %vm3118, %v3098
        %3129 = vst.msk [vmem:[#allocation2 + $0x50] sm:$0xff] %vm3118, %v3101
        %3130 = vst.msk [vmem:[#allocation2 + $0x58] sm:$0xff] %vm3118, %v3104
        %3131 = vst.msk [vmem:[#allocation2 + $0x60] sm:$0xff] %vm3118, %v3107
        %3132 = vst.msk [vmem:[#allocation2 + $0x68] sm:$0xff] %vm3118, %v3110
        %3133 = vst.msk [vmem:[#allocation2 + $0x70] sm:$0xff] %vm3118, %v3113
        %3134 = vst.msk [vmem:[#allocation2 + $0x78] sm:$0xff] %vm3118, %v3116
      $region36: #{conv2d_block.1} parent=31 // pred_fallthru
        _
      %v3135 = vld [vmem:[#allocation2] sm:$0xff]
      %v3136 = vld [vmem:[#allocation2 + $0x8] sm:$0xff]
      %v3137 = vld [vmem:[#allocation2 + $0x10] sm:$0xff]
      %v3138 = vld [vmem:[#allocation2 + $0x18] sm:$0xff]
      %v3139 = vld [vmem:[#allocation2 + $0x20] sm:$0xff]
      %v3140 = vld [vmem:[#allocation2 + $0x28] sm:$0xff]
      %v3141 = vld [vmem:[#allocation2 + $0x30] sm:$0xff]
      %v3142 = vld [vmem:[#allocation2 + $0x38] sm:$0xff]
      %v3143 = vld [vmem:[#allocation2 + $0x40] sm:$0xff]
      %v3144 = vld [vmem:[#allocation2 + $0x48] sm:$0xff]
      %v3145 = vld [vmem:[#allocation2 + $0x50] sm:$0xff]
      %v3146 = vld [vmem:[#allocation2 + $0x58] sm:$0xff]
      %v3147 = vld [vmem:[#allocation2 + $0x60] sm:$0xff]
      %v3148 = vld [vmem:[#allocation2 + $0x68] sm:$0xff]
      %v3149 = vld [vmem:[#allocation2 + $0x70] sm:$0xff]
      %v3150 = vld [vmem:[#allocation2 + $0x78] sm:$0xff]
      %v3151 = vld [vmem:[%s231] sm:$0xf]
      %v3152 = vld [vmem:[%s231 + $0x4] sm:$0xf]
      %v3153 = vld [vmem:[%s231 + $0x8] sm:$0xf]
      %v3154 = vld [vmem:[%s231 + $0xc] sm:$0xf]
      %v3155 = vld [vmem:[%s231 + $0x10] sm:$0x3]
      %v3156 = vld [vmem:[%s234] sm:$0x1]
      %v3158 = vlaneseq
      %v3159 = vshrl.u32 %v3158, 7
      %v3160 = vsub.s32 0, %v3159
      %v3161 = vrot.slane %v3156, %v3160
      %v3168 = vunpack.c.l.b16 %v3151
      %v3169 = vunpack.c.l.b16 %v3152
      %v3170 = vunpack.c.l.b16 %v3153
      %v3171 = vunpack.c.l.b16 %v3154
      %v3172 = vunpack.c.l.b16 %v3155
      %v3173 = vpack.c.b16 %v3169, %v3168
      %v3174 = vpack.c.b16 %v3171, %v3170
      %v3175 = vpack.c.b16 %v3172, %v3172
      %vm3178 = vcmask 293888
      %v3180 = vsel %vm3178, %v3135, 0
      %v3183 = vsel %vm3178, %v3136, 0
      %v3186 = vsel %vm3178, %v3137, 0
      %v3189 = vsel %vm3178, %v3138, 0
      %v3192 = vsel %vm3178, %v3139, 0
      %v3195 = vsel %vm3178, %v3140, 0
      %v3198 = vsel %vm3178, %v3141, 0
      %v3201 = vsel %vm3178, %v3142, 0
      %v3204 = vsel %vm3178, %v3143, 0
      %v3207 = vsel %vm3178, %v3144, 0
      %v3210 = vsel %vm3178, %v3145, 0
      %v3213 = vsel %vm3178, %v3146, 0
      %v3216 = vsel %vm3178, %v3147, 0
      %v3219 = vsel %vm3178, %v3148, 0
      %v3222 = vsel %vm3178, %v3149, 0
      %v3225 = vsel %vm3178, %v3150, 0
      %vm3227 = vcmask 1041408
      %v3229 = vsel %vm3227, %v3175, 0
      %3231 = vmatprep.subr.bf16.mxu0 0
      %3232 = vmatpush1.bf16.msra.mxu0 %v3173
      %3233 = vmatprep.subr.bf16.mxu0 0
      %3234 = vmatpush1.bf16.msra.mxu0 %v3174
      %3235 = vmatprep.subr.bf16.mxu0 0
      %3236 = vmatpush1.bf16.msra.mxu0 %v3229
      %3237 = vmatprep.subr.bf16.mxu0 0
      %3238 = vmatpush1.bf16.msra.mxu0 0
      %3239 = vmatprep.subr.bf16.mxu0 0
      %3240 = vmatpush1.bf16.msra.mxu0 0
      %3241 = vmatprep.subr.bf16.mxu0 0
      %3242 = vmatpush1.bf16.msra.mxu0 0
      %3243 = vmatprep.subr.bf16.mxu0 0
      %3244 = vmatpush1.bf16.msra.mxu0 0
      %3245 = vmatprep.subr.bf16.mxu0 0
      %3246 = vmatpush1.bf16.msra.mxu0 0
      %3247 = vmatprep.subr.bf16.mxu0 0
      %3248 = vmatpush1.bf16.msra.mxu0 0
      %3249 = vmatprep.subr.bf16.mxu0 0
      %3250 = vmatpush1.bf16.msra.mxu0 0
      %3251 = vmatprep.subr.bf16.mxu0 0
      %3252 = vmatpush1.bf16.msra.mxu0 0
      %3253 = vmatprep.subr.bf16.mxu0 0
      %3254 = vmatpush1.bf16.msra.mxu0 0
      %3255 = vmatprep.subr.bf16.mxu0 0
      %3256 = vmatpush1.bf16.msra.mxu0 0
      %3257 = vmatprep.subr.bf16.mxu0 0
      %3258 = vmatpush1.bf16.msra.mxu0 0
      %3259 = vmatprep.subr.bf16.mxu0 0
      %3260 = vmatpush1.bf16.msra.mxu0 0
      %3261 = vmatprep.subr.bf16.mxu0 0
      %3262 = vmatpush1.bf16.msra.mxu0 0
      %3263 = vmatprep.mubr.bf16.mxu0 0
      %3264 = vmatmul.mubr.bf16.gmra.mrb[0].mxu0 %v3180
      %v3265 = vpop.f32.mrb[0].mxu0
      %v3266 = vadd.f32 %v3161, %v3265
      %v3267 = vpop.f32.mrb[0].mxu0
      %v3268 = vpop.f32.mrb[0].mxu0
      %v3269 = vadd.f32 %v3161, %v3268
      %v3270 = vpop.f32.mrb[0].mxu0
      %3271 = vmatprep.mubr.bf16.mxu0 0
      %3272 = vmatmul.mubr.bf16.gmra.mrb[0].mxu0 %v3183
      %v3273 = vpop.f32.mrb[0].mxu0
      %v3274 = vadd.f32 %v3161, %v3273
      %v3275 = vpop.f32.mrb[0].mxu0
      %v3276 = vpop.f32.mrb[0].mxu0
      %v3277 = vadd.f32 %v3161, %v3276
      %v3278 = vpop.f32.mrb[0].mxu0
      %3279 = vmatprep.mubr.bf16.mxu0 0
      %3280 = vmatmul.mubr.bf16.gmra.mrb[0].mxu0 %v3186
      %v3281 = vpop.f32.mrb[0].mxu0
      %v3282 = vadd.f32 %v3161, %v3281
      %v3283 = vpop.f32.mrb[0].mxu0
      %v3284 = vpop.f32.mrb[0].mxu0
      %v3285 = vadd.f32 %v3161, %v3284
      %v3286 = vpop.f32.mrb[0].mxu0
      %3287 = vmatprep.mubr.bf16.mxu0 0
      %3288 = vmatmul.mubr.bf16.gmra.mrb[0].mxu0 %v3189
      %v3289 = vpop.f32.mrb[0].mxu0
      %v3290 = vadd.f32 %v3161, %v3289
      %v3291 = vpop.f32.mrb[0].mxu0
      %v3292 = vpop.f32.mrb[0].mxu0
      %v3293 = vadd.f32 %v3161, %v3292
      %v3294 = vpop.f32.mrb[0].mxu0
      %3295 = vmatprep.mubr.bf16.mxu0 0
      %3296 = vmatmul.mubr.bf16.gmra.mrb[0].mxu0 %v3192
      %v3297 = vpop.f32.mrb[0].mxu0
      %v3298 = vadd.f32 %v3161, %v3297
      %v3299 = vpop.f32.mrb[0].mxu0
      %v3300 = vpop.f32.mrb[0].mxu0
      %v3301 = vadd.f32 %v3161, %v3300
      %v3302 = vpop.f32.mrb[0].mxu0
      %3303 = vmatprep.mubr.bf16.mxu0 0
      %3304 = vmatmul.mubr.bf16.gmra.mrb[0].mxu0 %v3195
      %v3305 = vpop.f32.mrb[0].mxu0
      %v3306 = vadd.f32 %v3161, %v3305
      %v3307 = vpop.f32.mrb[0].mxu0
      %v3308 = vpop.f32.mrb[0].mxu0
      %v3309 = vadd.f32 %v3161, %v3308
      %v3310 = vpop.f32.mrb[0].mxu0
      %3311 = vmatprep.mubr.bf16.mxu0 0
      %3312 = vmatmul.mubr.bf16.gmra.mrb[0].mxu0 %v3198
      %v3313 = vpop.f32.mrb[0].mxu0
      %v3314 = vadd.f32 %v3161, %v3313
      %v3315 = vpop.f32.mrb[0].mxu0
      %v3316 = vpop.f32.mrb[0].mxu0
      %v3317 = vadd.f32 %v3161, %v3316
      %v3318 = vpop.f32.mrb[0].mxu0
      %3319 = vmatprep.mubr.bf16.mxu0 0
      %3320 = vmatmul.mubr.bf16.gmra.mrb[0].mxu0 %v3201
      %v3321 = vpop.f32.mrb[0].mxu0
      %v3322 = vadd.f32 %v3161, %v3321
      %v3323 = vpop.f32.mrb[0].mxu0
      %v3324 = vpop.f32.mrb[0].mxu0
      %v3325 = vadd.f32 %v3161, %v3324
      %v3326 = vpop.f32.mrb[0].mxu0
      %3327 = vmatprep.mubr.bf16.mxu0 0
      %3328 = vmatmul.mubr.bf16.gmra.mrb[0].mxu0 %v3204
      %v3329 = vpop.f32.mrb[0].mxu0
      %v3330 = vadd.f32 %v3161, %v3329
      %v3331 = vpop.f32.mrb[0].mxu0
      %v3332 = vpop.f32.mrb[0].mxu0
      %v3333 = vadd.f32 %v3161, %v3332
      %v3334 = vpop.f32.mrb[0].mxu0
      %3335 = vmatprep.mubr.bf16.mxu0 0
      %3336 = vmatmul.mubr.bf16.gmra.mrb[0].mxu0 %v3207
      %v3337 = vpop.f32.mrb[0].mxu0
      %v3338 = vadd.f32 %v3161, %v3337
      %v3339 = vpop.f32.mrb[0].mxu0
      %v3340 = vpop.f32.mrb[0].mxu0
      %v3341 = vadd.f32 %v3161, %v3340
      %v3342 = vpop.f32.mrb[0].mxu0
      %3343 = vmatprep.mubr.bf16.mxu0 0
      %3344 = vmatmul.mubr.bf16.gmra.mrb[0].mxu0 %v3210
      %v3345 = vpop.f32.mrb[0].mxu0
      %v3346 = vadd.f32 %v3161, %v3345
      %v3347 = vpop.f32.mrb[0].mxu0
      %v3348 = vpop.f32.mrb[0].mxu0
      %v3349 = vadd.f32 %v3161, %v3348
      %v3350 = vpop.f32.mrb[0].mxu0
      %3351 = vmatprep.mubr.bf16.mxu0 0
      %3352 = vmatmul.mubr.bf16.gmra.mrb[0].mxu0 %v3213
      %v3353 = vpop.f32.mrb[0].mxu0
      %v3354 = vadd.f32 %v3161, %v3353
      %v3355 = vpop.f32.mrb[0].mxu0
      %v3356 = vpop.f32.mrb[0].mxu0
      %v3357 = vadd.f32 %v3161, %v3356
      %v3358 = vpop.f32.mrb[0].mxu0
      %3359 = vmatprep.mubr.bf16.mxu0 0
      %3360 = vmatmul.mubr.bf16.gmra.mrb[0].mxu0 %v3216
      %v3361 = vpop.f32.mrb[0].mxu0
      %v3362 = vadd.f32 %v3161, %v3361
      %v3363 = vpop.f32.mrb[0].mxu0
      %v3364 = vpop.f32.mrb[0].mxu0
      %v3365 = vadd.f32 %v3161, %v3364
      %v3366 = vpop.f32.mrb[0].mxu0
      %3367 = vmatprep.mubr.bf16.mxu0 0
      %3368 = vmatmul.mubr.bf16.gmra.mrb[0].mxu0 %v3219
      %v3369 = vpop.f32.mrb[0].mxu0
      %v3370 = vadd.f32 %v3161, %v3369
      %v3371 = vpop.f32.mrb[0].mxu0
      %v3372 = vpop.f32.mrb[0].mxu0
      %v3373 = vadd.f32 %v3161, %v3372
      %v3374 = vpop.f32.mrb[0].mxu0
      %3375 = vmatprep.mubr.bf16.mxu0 0
      %3376 = vmatmul.mubr.bf16.gmra.mrb[0].mxu0 %v3222
      %v3377 = vpop.f32.mrb[0].mxu0
      %v3378 = vadd.f32 %v3161, %v3377
      %v3379 = vpop.f32.mrb[0].mxu0
      %v3380 = vpop.f32.mrb[0].mxu0
      %v3381 = vadd.f32 %v3161, %v3380
      %v3382 = vpop.f32.mrb[0].mxu0
      %3383 = vmatprep.mubr.bf16.mxu0 0
      %3384 = vmatmul.mubr.bf16.gmra.mrb[0].mxu0 %v3225
      %v3385 = vpop.f32.mrb[0].mxu0
      %v3386 = vadd.f32 %v3161, %v3385
      %v3387 = vpop.f32.mrb[0].mxu0
      %v3388 = vpop.f32.mrb[0].mxu0
      %v3389 = vadd.f32 %v3161, %v3388
      %v3390 = vpop.f32.mrb[0].mxu0
      %3391 = vdwg.mxu0
      %3392 = vxpose.xlu0.b32.start [1/16] %v3266, 128
      %3393 = vxpose.xlu0.b32.cont [2/16] %v3269, 128
      %3394 = vxpose.xlu0.b32.cont [3/16] %v3274, 128
      %3395 = vxpose.xlu0.b32.cont [4/16] %v3277, 128
      %3396 = vxpose.xlu0.b32.cont [5/16] %v3282, 128
      %3397 = vxpose.xlu0.b32.cont [6/16] %v3285, 128
      %3398 = vxpose.xlu0.b32.cont [7/16] %v3290, 128
      %3399 = vxpose.xlu0.b32.cont [8/16] %v3293, 128
      %3400 = vxpose.xlu0.b32.cont [9/16] %v3298, 128
      %3401 = vxpose.xlu0.b32.cont [10/16] %v3301, 128
      %3402 = vxpose.xlu0.b32.cont [11/16] %v3306, 128
      %3403 = vxpose.xlu0.b32.cont [12/16] %v3309, 128
      %3404 = vxpose.xlu0.b32.cont [13/16] %v3314, 128
      %3405 = vxpose.xlu0.b32.cont [14/16] %v3317, 128
      %3406 = vxpose.xlu0.b32.cont [15/16] %v3322, 128
      %3407 = vxpose.xlu0.b32.end [16/16] %v3325, 128
      %v3408 = vpop.trf.xlu0
      %v3409 = vpop.trf.xlu0
      %v3410 = vpop.trf.xlu0
      %v3411 = vpop.trf.xlu0
      %v3412 = vpop.trf.xlu0
      %v3413 = vpop.trf.xlu0
      %v3414 = vpop.trf.xlu0
      %v3415 = vpop.trf.xlu0
      %v3416 = vpop.trf.xlu0
      %v3417 = vpop.trf.xlu0
      %v3418 = vpop.trf.xlu0
      %v3419 = vpop.trf.xlu0
      %v3420 = vpop.trf.xlu0
      %v3421 = vpop.trf.xlu0
      %v3422 = vpop.trf.xlu0
      %v3423 = vpop.trf.xlu0
      %3424 = vxpose.xlu0.b32.start [1/16] %v3330, 128
      %3425 = vxpose.xlu0.b32.cont [2/16] %v3333, 128
      %3426 = vxpose.xlu0.b32.cont [3/16] %v3338, 128
      %3427 = vxpose.xlu0.b32.cont [4/16] %v3341, 128
      %3428 = vxpose.xlu0.b32.cont [5/16] %v3346, 128
      %3429 = vxpose.xlu0.b32.cont [6/16] %v3349, 128
      %3430 = vxpose.xlu0.b32.cont [7/16] %v3354, 128
      %3431 = vxpose.xlu0.b32.cont [8/16] %v3357, 128
      %3432 = vxpose.xlu0.b32.cont [9/16] %v3362, 128
      %3433 = vxpose.xlu0.b32.cont [10/16] %v3365, 128
      %3434 = vxpose.xlu0.b32.cont [11/16] %v3370, 128
      %3435 = vxpose.xlu0.b32.cont [12/16] %v3373, 128
      %3436 = vxpose.xlu0.b32.cont [13/16] %v3378, 128
      %3437 = vxpose.xlu0.b32.cont [14/16] %v3381, 128
      %3438 = vxpose.xlu0.b32.cont [15/16] %v3386, 128
      %3439 = vxpose.xlu0.b32.end [16/16] %v3389, 128
      %v3440 = vpop.trf.xlu0
      %v3441 = vpop.trf.xlu0
      %v3442 = vpop.trf.xlu0
      %v3443 = vpop.trf.xlu0
      %v3444 = vpop.trf.xlu0
      %v3445 = vpop.trf.xlu0
      %v3446 = vpop.trf.xlu0
      %v3447 = vpop.trf.xlu0
      %v3448 = vpop.trf.xlu0
      %v3449 = vpop.trf.xlu0
      %v3450 = vpop.trf.xlu0
      %v3451 = vpop.trf.xlu0
      %v3452 = vpop.trf.xlu0
      %v3453 = vpop.trf.xlu0
      %v3454 = vpop.trf.xlu0
      %v3455 = vpop.trf.xlu0
      %3456 = vst [vmem:[%s247] sm:$0xff] %v3408
      %3457 = vst [vmem:[%s247 + $0x8] sm:$0xff] %v3440
      %s3458 = smul.u32 2, %s20
      %p3459 = scmp.lt.s32.totalorder %s19, 1
      %s3460 = scalar_select %p3459, %s19, 1
      %p3461 = scmp.lt.s32.totalorder %s21, 0
      %s3462 = scalar_select %p3461, %s21, 0
      %p3463 = scmp.lt.s32.totalorder %s3458, 1
      %s3464 = scalar_select %p3463, %s3458, 1
      %s3465 = smul.addr %s3462, 2
      %s3466 = sadd.s32 %s3464, %s3465
      %s3467 = smul.addr %s3460, 2
      %s3468 = sadd.s32 %s3466, %s3467
      %s3469 = smul.addr %s3468, 8
      %s3470 = scalar_lea.vmem %s3, %s3469
      // Predicated region
      $region37: #{conv2d_block.1} parent=31 // pred_check
        %p3471 = pneg %p135
      $region38: #{conv2d_block.1} parent=31 // pred_check_branch
        %3473 = sbr.rel (%p3471) target = $region40
      $region39: #{conv2d_block.1} parent=31 // pred_region
        %s3474 = smul.u32 2, %s20
      $region40: #{conv2d_block.1} parent=31 // pred_fallthru
        _
    $region32: #{conv2d_block.1} parent=5 // pred_fallthru
      _
    %p3475 = scmp.le.s32.totalorder 2, %s9
    // Predicated region
    $region41: #{conv2d_block.1} parent=5 // pred_check
      %p3476 = pneg %p3475
    $region42: #{conv2d_block.1} parent=5 // pred_check_branch
      %3478 = sbr.rel (%p3476) target = $region44
    $region43: #{conv2d_block.1} parent=5 // pred_region
      %s3479 = ssub.s32 %s9, 2
      // Predicated region
      $region45: #{conv2d_block.1} parent=43 // pred_check
        %p3480 = pneg %p141
      $region46: #{conv2d_block.1} parent=43 // pred_check_branch
        %3482 = sbr.rel (%p3480) target = $region48
      $region47: #{conv2d_block.1} parent=43 // pred_region
        %s3483 = smul.u32 2, %s23
        %p3484 = scmp.lt.s32.totalorder %s22, 1
        %s3485 = scalar_select %p3484, %s22, 1
        %p3486 = scmp.lt.s32.totalorder %s24, 0
        %s3487 = scalar_select %p3486, %s24, 0
        %p3488 = scmp.lt.s32.totalorder %s3483, 1
        %s3489 = scalar_select %p3488, %s3483, 1
        %s3490 = smul.addr %s3487, 2
        %s3491 = sadd.s32 %s3489, %s3490
        %s3492 = smul.addr %s3485, 2
        %s3493 = sadd.s32 %s3491, %s3492
        %s3494 = smul.addr %s3493, 8
        %s3495 = scalar_lea.vmem %s3, %s3494
      $region48: #{conv2d_block.1} parent=43 // pred_fallthru
        _
    $region44: #{conv2d_block.1} parent=5 // pred_fallthru
      _
  $region6: #{conv2d_block.1} parent=0 // loop_footer
    %s13 = sadd.s32 1, %s9
  $region7: #{conv2d_block.1} parent=0 // loop_footer_branch
    %8 = sbr.rel target = $region3
  $region8: #{conv2d_block.1} parent=0 // loop_exit
    _

</llo_original>
